<compile_context>
chip_gen: v5e
topology: v5e:2x2
jax: 0.10.0
libtpu: 0.0.40
codegen_flags: <defaults>
</compile_context>

<pallas_src>
import functools

import jax
import jax.numpy as jnp
from jax import lax
from jax.experimental import pallas as pl
from jax.experimental.pallas import tpu as pltpu

CFG = dict(
    vocab_size=128,
    context_length=16,
    emb_dim=32,
    n_heads=4,
    n_layers=2,
    drop_rate=0.0,
    qkv_bias=False,
)


# ---------------------------------------------------------------------------
# in-kernel helpers (f32 arithmetic)
# ---------------------------------------------------------------------------
def _layernorm(x, scale, shift, eps=1e-5):
    # matches torch: mean / population variance (unbiased=False) over last dim
    mean = jnp.mean(x, axis=-1, keepdims=True)
    var = jnp.mean((x - mean) ** 2, axis=-1, keepdims=True)
    return scale * ((x - mean) * lax.rsqrt(var + eps)) + shift


def _gelu(x):
    # tanh-approximation GELU, exactly as in the PyTorch module
    return 0.5 * x * (1.0 + jnp.tanh(
        jnp.float32(0.7978845608028654) * (x + 0.044715 * (x * x * x))))


# ---------------------------------------------------------------------------
# Kernel 1: one grid step == one transformer layer (carry in output block)
# ---------------------------------------------------------------------------
def transformer_layers_kernel(x_ref,
                              ln1_s_ref, ln1_b_ref, wqkv_ref, wo_ref, bo_ref,
                              ln2_s_ref, ln2_b_ref, w1_ref, b1_ref,
                              w2_ref, b2_ref,
                              lnf_s_ref, lnf_b_ref,
                              h_out_ref,
                              *, n_layers, n_heads, batch, seq):
    l = pl.program_id(0)
    B, T, H = batch, seq, n_heads
    BT = B * T

    @pl.when(l == 0)
    def _():
        h_out_ref[...] = x_ref[...]          # initialize the resident carry

    x = h_out_ref[...]                       # (BT, D) f32 carry
    D = x.shape[-1]
    hd = D // H
    G = H * B                                # one attention "group" per (head, batch)

    # additive causal mask (T, T): finite bias so exp() underflows to 0
    row = lax.broadcasted_iota(jnp.int32, (T, T), 0)
    col = lax.broadcasted_iota(jnp.int32, (T, T), 1)
    causal_bias = jnp.where(col > row, jnp.float32(-1e30), jnp.float32(0.0))

    def split_heads(m2d):
        # (BT, D) -> (H*B, T, hd); group index g = h*B + b
        return jnp.transpose(m2d.reshape(BT, H, hd), (1, 0, 2)).reshape(G, T, hd)

    def merge_heads(m3d):
        # (H*B, T, hd) -> (BT, D), head-major column order (matches torch view)
        return jnp.transpose(m3d.reshape(H, BT, hd), (1, 0, 2)).reshape(BT, D)

    # ---------------- attention sub-layer ----------------
    h = _layernorm(x, ln1_s_ref[...], ln1_b_ref[...])
    # fused QKV matmul; 1/sqrt(hd) is pre-folded into the Q columns (wrapper)
    qkv = jnp.dot(h.astype(jnp.bfloat16), wqkv_ref[...],
                  preferred_element_type=jnp.float32)            # (BT, 3D) f32

    # NOTE: at D=32 these lane slices/reshapes cross vreg tiles; at real model
    # sizes the slice boundaries (D, 2D) are multiples of 128 and become cheap.
    q = split_heads(qkv[:, 0 * D:1 * D]).astype(jnp.bfloat16)     # (G, T, hd)
    k = split_heads(qkv[:, 1 * D:2 * D]).astype(jnp.bfloat16)
    v = split_heads(qkv[:, 2 * D:3 * D]).astype(jnp.bfloat16)

    # single-batch-dim contraction over all (head, batch) groups
    s = jnp.einsum('gqd,gkd->gqk', q, k,
                   preferred_element_type=jnp.float32)            # (G, T, T) f32
    s = s + causal_bias[None, :, :]
    s = s - jnp.max(s, axis=-1, keepdims=True)
    p = jnp.exp(s)
    p = p * pl.reciprocal(jnp.sum(p, axis=-1, keepdims=True), approx=True)
    # attention dropout is identity (inference / drop_rate=0)
    ctx = jnp.einsum('gqk,gkd->gqd', p.astype(jnp.bfloat16), v,
                     preferred_element_type=jnp.float32)          # (G, T, hd)
    ctx = merge_heads(ctx)                                        # (BT, D)

    attn = jnp.dot(ctx.astype(jnp.bfloat16), wo_ref[...],
                   preferred_element_type=jnp.float32) + bo_ref[...]
    x = x + attn                                  # residual (drop_resid = id)

    # ---------------- feed-forward sub-layer ----------------
    h = _layernorm(x, ln2_s_ref[...], ln2_b_ref[...])
    h = jnp.dot(h.astype(jnp.bfloat16), w1_ref[...],
                preferred_element_type=jnp.float32) + b1_ref[...]
    h = _gelu(h)
    h = jnp.dot(h.astype(jnp.bfloat16), w2_ref[...],
                preferred_element_type=jnp.float32) + b2_ref[...]
    x = x + h                                     # residual

    h_out_ref[...] = x                            # carry to next layer

    @pl.when(l == n_layers - 1)
    def _():
        # final LayerNorm fused onto the last layer's grid step
        h_out_ref[...] = _layernorm(x, lnf_s_ref[...], lnf_b_ref[...])


# ---------------------------------------------------------------------------
# Kernel 2: LM head, tiled over the vocab axis (lane-dense output blocks)
# ---------------------------------------------------------------------------
def lm_head_kernel(h_ref, wout_ref, logits_ref):
    logits_ref[...] = jnp.dot(h_ref[...].astype(jnp.bfloat16), wout_ref[...],
                              preferred_element_type=jnp.float32)


# ---------------------------------------------------------------------------
# parameter init (deterministic, synthetic) + packing for the fused kernels
# ---------------------------------------------------------------------------
def init_params(key, cfg):
    D, V, C, L = cfg['emb_dim'], cfg['vocab_size'], cfg['context_length'], cfg['n_layers']
    F = 4 * D
    keys = jax.random.split(key, 3 + L)

    def w(k, shape, scale=0.02):
        return (scale * jax.random.normal(k, shape)).astype(jnp.float32)

    params = {
        'tok_emb': w(keys[0], (V, D)),
        'pos_emb': w(keys[1], (C, D)),
        'final_ln_s': jnp.ones((1, D), jnp.float32),
        'final_ln_b': jnp.zeros((1, D), jnp.float32),
        'out_w': w(keys[2], (D, V)),
        'blocks': [],
    }
    for layer in range(L):
        ks = jax.random.split(keys[3 + layer], 6)
        params['blocks'].append(dict(
            ln1_s=jnp.ones((1, D), jnp.float32),
            ln1_b=jnp.zeros((1, D), jnp.float32),
            wq=w(ks[0], (D, D)),                  # qkv_bias=False -> no q/k/v bias
            wk=w(ks[1], (D, D)),
            wv=w(ks[2], (D, D)),
            wo=w(ks[3], (D, D)),
            bo=jnp.zeros((1, D), jnp.float32),
            ln2_s=jnp.ones((1, D), jnp.float32),
            ln2_b=jnp.zeros((1, D), jnp.float32),
            w1=w(ks[4], (D, F)),
            b1=jnp.zeros((1, F), jnp.float32),
            w2=w(ks[5], (F, D)),
            b2=jnp.zeros((1, D), jnp.float32),
        ))
    return params


def pack_params(params, cfg):
    """Stack per-layer weights into (L, ...) arrays, fuse Wq|Wk|Wv into one
    (D, 3D) matrix with 1/sqrt(head_dim) folded into the Q columns, and store
    all matmul weight slabs in bf16 (MXU-peak inputs, f32 accumulation)."""
    D = cfg['emb_dim']
    hd = D // cfg['n_heads']
    q_scale = jnp.float32(1.0 / (hd ** 0.5))
    blks = params['blocks']

    def stk(name):
        return jnp.stack([b[name] for b in blks], axis=0)

    wqkv = jnp.stack(
        [jnp.concatenate([b['wq'] * q_scale, b['wk'], b['wv']], axis=1)
         for b in blks], axis=0)                                   # (L, D, 3D)

    return dict(
        tok_emb=params['tok_emb'], pos_emb=params['pos_emb'],
        ln1_s=stk('ln1_s'), ln1_b=stk('ln1_b'),
        wqkv=wqkv.astype(jnp.bfloat16),
        wo=stk('wo').astype(jnp.bfloat16), bo=stk('bo'),
        ln2_s=stk('ln2_s'), ln2_b=stk('ln2_b'),
        w1=stk('w1').astype(jnp.bfloat16), b1=stk('b1'),
        w2=stk('w2').astype(jnp.bfloat16), b2=stk('b2'),
        final_ln_s=params['final_ln_s'], final_ln_b=params['final_ln_b'],
        out_w=params['out_w'].astype(jnp.bfloat16),
    )


def _vmem_limit_bytes(*arrays):
    """Scoped-VMEM limit derived from the actual operand bytes (+ headroom),
    clamped so it stays inside every generation's physical VMEM."""
    total = sum(int(a.size) * a.dtype.itemsize for a in arrays)
    return int(min(64 * 1024 * 1024, max(16 * 1024 * 1024, 4 * total)))


# ---------------------------------------------------------------------------
# full model forward (two pallas_calls: layers+final-LN, then V-tiled LM head)
# ---------------------------------------------------------------------------
def gpt_forward(in_idx, packed, cfg):
    B, T = in_idx.shape
    D, V = cfg['emb_dim'], cfg['vocab_size']
    L, H = cfg['n_layers'], cfg['n_heads']
    BT = B * T

    # embedding gather + positional add: plain-JAX glue (tiny, outside kernel)
    tok = jnp.take(packed['tok_emb'], in_idx, axis=0)        # (B, T, D)
    pos = packed['pos_emb'][:T]                              # (T, D)
    x = (tok + pos[None, :, :]).reshape(BT, D)               # drop_emb = identity

    layer_ws = (packed['ln1_s'], packed['ln1_b'], packed['wqkv'], packed['wo'],
                packed['bo'], packed['ln2_s'], packed['ln2_b'],
                packed['w1'], packed['b1'], packed['w2'], packed['b2'])

    def per_layer_spec(arr):
        # (L, ...) stack: fetch only layer l's slab; default double-buffering
        # prefetches layer l+1 weights under layer l compute.
        tail = arr.shape[1:]
        return pl.BlockSpec((None,) + tail,
                            lambda l, _n=len(tail): (l,) + (0,) * _n)

    def const_spec(arr):
        # constant across the layer grid -> single buffer (no VMEM waste)
        nd = arr.ndim
        return pl.BlockSpec(arr.shape, lambda l, _n=nd: (0,) * _n,
                            pipeline_mode=pl.Buffered(1))

    kernel1 = functools.partial(transformer_layers_kernel,
                                n_layers=L, n_heads=H, batch=B, seq=T)
    hidden = pl.pallas_call(
        kernel1,
        out_shape=jax.ShapeDtypeStruct((BT, D), jnp.float32),
        grid=(L,),                                           # layers on the grid
        in_specs=[const_spec(x)]
                 + [per_layer_spec(w) for w in layer_ws]
                 + [const_spec(packed['final_ln_s']),
                    const_spec(packed['final_ln_b'])],
        out_specs=pl.BlockSpec((BT, D), lambda l: (0, 0)),   # resident carry
        compiler_params=pltpu.CompilerParams(
            dimension_semantics=("arbitrary",),              # sequential carry
            vmem_limit_bytes=_vmem_limit_bytes(
                x, *layer_ws, packed['final_ln_s'], packed['final_ln_b'])),
    )(x, *layer_ws, packed['final_ln_s'], packed['final_ln_b'])

    # LM head tiled over V: out_w block is (D, TILE_V), output stays lane-dense
    TILE_V = min(V, 2048)
    assert V % TILE_V == 0 and TILE_V % 128 == 0
    logits = pl.pallas_call(
        lm_head_kernel,
        out_shape=jax.ShapeDtypeStruct((BT, V), jnp.float32),
        grid=(V // TILE_V,),
        in_specs=[pl.BlockSpec((BT, D), lambda v: (0, 0),
                               pipeline_mode=pl.Buffered(1)),
                  pl.BlockSpec((D, TILE_V), lambda v: (0, v))],
        out_specs=pl.BlockSpec((BT, TILE_V), lambda v: (0, v)),
        compiler_params=pltpu.CompilerParams(
            dimension_semantics=("parallel",),
            vmem_limit_bytes=_vmem_limit_bytes(hidden, packed['out_w'])),
    )(hidden, packed['out_w'])

    return logits.reshape(B, T, V)


# ---------------------------------------------------------------------------
if __name__ == "__main__":
    key = jax.random.PRNGKey(0)
    pkey, dkey = jax.random.split(key)

    params = init_params(pkey, CFG)
    packed = pack_params(params, CFG)

    batch, seq = 2, 8
    in_idx = jax.random.randint(dkey, (batch, seq), 0, CFG['vocab_size'],
                                dtype=jnp.int32)

    fwd = jax.jit(functools.partial(gpt_forward, cfg=CFG))
    logits = jax.block_until_ready(fwd(in_idx, packed))

    assert logits.shape == (batch, seq, CFG['vocab_size'])
    assert logits.dtype == jnp.float32
    assert bool(jnp.all(jnp.isfinite(logits)))
    print("KERNEL_OK")
</pallas_src>

<mosaic_0001>
module attributes {stable_mosaic.version = 11 : i64} {
  func.func @lm_head_kernel(%arg0: i32, %arg1: memref<16x32xf32, #tpu.memory_space<vmem>>, %arg2: memref<32x128xbf16, #tpu.memory_space<vmem>>, %arg3: memref<16x128xf32, #tpu.memory_space<vmem>>) attributes {dimension_semantics = [#tpu.dimension_semantics<parallel>], iteration_bounds = array<i64: 1>, scalar_prefetch = 0 : i64, scratch_operands = 0 : i64, tpu.core_type = #tpu.core_type<tc>, window_params = [{pipeline_mode = #tpu.pipeline_mode<synchronous>, transform_indices = @transform_0, window_bounds = array<i64: 16, 32>}, {transform_indices = @transform_1, window_bounds = array<i64: 32, 128>}, {transform_indices = @transform_2, window_bounds = array<i64: 16, 128>}]} {
    %c0 = arith.constant 0 : index
    %c0_0 = arith.constant 0 : index
    %0 = vector.load %arg1[%c0, %c0_0] : memref<16x32xf32, #tpu.memory_space<vmem>>, vector<16x32xf32>
    %1 = arith.truncf %0 : vector<16x32xf32> to vector<16x32xbf16>
    %c0_1 = arith.constant 0 : index
    %c0_2 = arith.constant 0 : index
    %2 = vector.load %arg2[%c0_1, %c0_2] : memref<32x128xbf16, #tpu.memory_space<vmem>>, vector<32x128xbf16>
    %cst = arith.constant dense<0.000000e+00> : vector<16x128xf32>
    %3 = tpu.matmul %1, %2, %cst {dimension_numbers = #tpu.dot_dimension_numbers<[1], [0], [0], [1], [0, 0, 1, 1], [], []>} : vector<16x32xbf16>, vector<32x128xbf16>, vector<16x128xf32> -> vector<16x128xf32>
    %c0_3 = arith.constant 0 : index
    %c0_4 = arith.constant 0 : index
    %4 = vector.load %arg3[%c0_3, %c0_4] : memref<16x128xf32, #tpu.memory_space<vmem>>, vector<16x128xf32>
    tpu.vector_store %arg3[%c0_3, %c0_4], %3 {strides = array<i32>} : memref<16x128xf32, #tpu.memory_space<vmem>>, vector<16x128xf32>,
    return
  }
  func.func @transform_0(%arg0: i32) -> (i32, i32) {
    %c0_i32 = arith.constant 0 : i32
    %c0_i32_0 = arith.constant 0 : i32
    %c0_i32_1 = arith.constant 0 : i32
    return %c0_i32, %c0_i32_0 : i32, i32
  }
  func.func @transform_1(%arg0: i32) -> (i32, i32) {
    %c0_i32 = arith.constant 0 : i32
    %c0_i32_0 = arith.constant 0 : i32
    return %c0_i32, %arg0 : i32, i32
  }
  func.func @transform_2(%arg0: i32) -> (i32, i32) {
    %c0_i32 = arith.constant 0 : i32
    %c0_i32_0 = arith.constant 0 : i32
    return %c0_i32, %arg0 : i32, i32
  }
}

module attributes {stable_mosaic.version = 11 : i64} {
  func.func @transformer_layers_kernel(%arg0: i32, %arg1: memref<16x32xf32, #tpu.memory_space<vmem>>, %arg2: memref<1x1x32xf32, #tpu.memory_space<vmem>>, %arg3: memref<1x1x32xf32, #tpu.memory_space<vmem>>, %arg4: memref<1x32x96xbf16, #tpu.memory_space<vmem>>, %arg5: memref<1x32x32xbf16, #tpu.memory_space<vmem>>, %arg6: memref<1x1x32xf32, #tpu.memory_space<vmem>>, %arg7: memref<1x1x32xf32, #tpu.memory_space<vmem>>, %arg8: memref<1x1x32xf32, #tpu.memory_space<vmem>>, %arg9: memref<1x32x128xbf16, #tpu.memory_space<vmem>>, %arg10: memref<1x1x128xf32, #tpu.memory_space<vmem>>, %arg11: memref<1x128x32xbf16, #tpu.memory_space<vmem>>, %arg12: memref<1x1x32xf32, #tpu.memory_space<vmem>>, %arg13: memref<1x32xf32, #tpu.memory_space<vmem>>, %arg14: memref<1x32xf32, #tpu.memory_space<vmem>>, %arg15: memref<16x32xf32, #tpu.memory_space<vmem>>) attributes {dimension_semantics = [#tpu.dimension_semantics<arbitrary>], iteration_bounds = array<i64: 2>, scalar_prefetch = 0 : i64, scratch_operands = 0 : i64, tpu.core_type = #tpu.core_type<tc>, window_params = [{pipeline_mode = #tpu.pipeline_mode<synchronous>, transform_indices = @transform_0, window_bounds = array<i64: 16, 32>}, {transform_indices = @transform_1, window_bounds = array<i64: 1, 1, 32>}, {transform_indices = @transform_2, window_bounds = array<i64: 1, 1, 32>}, {transform_indices = @transform_3, window_bounds = array<i64: 1, 32, 96>}, {transform_indices = @transform_4, window_bounds = array<i64: 1, 32, 32>}, {transform_indices = @transform_5, window_bounds = array<i64: 1, 1, 32>}, {transform_indices = @transform_6, window_bounds = array<i64: 1, 1, 32>}, {transform_indices = @transform_7, window_bounds = array<i64: 1, 1, 32>}, {transform_indices = @transform_8, window_bounds = array<i64: 1, 32, 128>}, {transform_indices = @transform_9, window_bounds = array<i64: 1, 1, 128>}, {transform_indices = @transform_10, window_bounds = array<i64: 1, 128, 32>}, {transform_indices = @transform_11, window_bounds = array<i64: 1, 1, 32>}, {pipeline_mode = #tpu.pipeline_mode<synchronous>, transform_indices = @transform_12, window_bounds = array<i64: 1, 32>}, {pipeline_mode = #tpu.pipeline_mode<synchronous>, transform_indices = @transform_13, window_bounds = array<i64: 1, 32>}, {pipeline_mode = #tpu.pipeline_mode<synchronous>, transform_indices = @transform_14, window_bounds = array<i64: 16, 32>}]} {
    %c0_i32 = arith.constant 0 : i32
    %0 = arith.cmpi eq, %arg0, %c0_i32 : i32
    %1 = arith.extui %0 : i1 to i32
    %c0_i32_0 = arith.constant 0 : i32
    %2 = arith.cmpi ne, %1, %c0_i32_0 : i32
    scf.if %2 {
      %c0_61 = arith.constant 0 : index
      %c0_62 = arith.constant 0 : index
      %143 = vector.load %arg1[%c0_61, %c0_62] : memref<16x32xf32, #tpu.memory_space<vmem>>, vector<16x32xf32>
      %c0_63 = arith.constant 0 : index
      %c0_64 = arith.constant 0 : index
      %144 = vector.load %arg15[%c0_63, %c0_64] : memref<16x32xf32, #tpu.memory_space<vmem>>, vector<16x32xf32>
      tpu.vector_store %arg15[%c0_63, %c0_64], %143 {strides = array<i32>} : memref<16x32xf32, #tpu.memory_space<vmem>>, vector<16x32xf32>,
    } else {
    }
    %c0 = arith.constant 0 : index
    %c0_1 = arith.constant 0 : index
    %3 = vector.load %arg15[%c0, %c0_1] : memref<16x32xf32, #tpu.memory_space<vmem>>, vector<16x32xf32>
    %4 = tpu.iota {dimensions = array<i32: 0>} : vector<8x8xi32>
    %5 = tpu.iota {dimensions = array<i32: 1>} : vector<8x8xi32>
    %6 = arith.cmpi sgt, %5, %4 : vector<8x8xi32>
    %cst = arith.constant -1.000000e+30 : f32
    %cst_2 = arith.constant 0.000000e+00 : f32
    %7 = vector.broadcast %cst : f32 to vector<8x8xf32>
    %8 = vector.broadcast %cst_2 : f32 to vector<8x8xf32>
    %9 = arith.select %6, %7, %8 : vector<8x8xi1>, vector<8x8xf32>
    %c0_3 = arith.constant 0 : index
    %c0_4 = arith.constant 0 : index
    %c0_5 = arith.constant 0 : index
    %10 = vector.load %arg2[%c0_3, %c0_4, %c0_5] : memref<1x1x32xf32, #tpu.memory_space<vmem>>, vector<1x1x32xf32>
    %11 = vector.shape_cast %10 : vector<1x1x32xf32> to vector<1x32xf32>
    %c0_6 = arith.constant 0 : index
    %c0_7 = arith.constant 0 : index
    %c0_8 = arith.constant 0 : index
    %12 = vector.load %arg3[%c0_6, %c0_7, %c0_8] : memref<1x1x32xf32, #tpu.memory_space<vmem>>, vector<1x1x32xf32>
    %13 = vector.shape_cast %12 : vector<1x1x32xf32> to vector<1x32xf32>
    %cst_9 = arith.constant dense<0.000000e+00> : vector<16xf32>
    %14 = vector.multi_reduction <add>, %3, %cst_9 [1] : vector<16x32xf32> to vector<16xf32>
    %15 = vector.shape_cast %14 : vector<16xf32> to vector<16x1xf32>
    %cst_10 = arith.constant 3.200000e+01 : f32
    %16 = vector.broadcast %cst_10 : f32 to vector<16x1xf32>
    %17 = arith.divf %15, %16 : vector<16x1xf32>
    %18 = vector.broadcast %17 : vector<16x1xf32> to vector<16x32xf32>
    %19 = arith.subf %3, %18 : vector<16x32xf32>
    %20 = arith.mulf %19, %19 : vector<16x32xf32>
    %cst_11 = arith.constant dense<0.000000e+00> : vector<16xf32>
    %21 = vector.multi_reduction <add>, %20, %cst_11 [1] : vector<16x32xf32> to vector<16xf32>
    %22 = vector.shape_cast %21 : vector<16xf32> to vector<16x1xf32>
    %cst_12 = arith.constant 3.200000e+01 : f32
    %23 = vector.broadcast %cst_12 : f32 to vector<16x1xf32>
    %24 = arith.divf %22, %23 : vector<16x1xf32>
    %25 = vector.broadcast %17 : vector<16x1xf32> to vector<16x32xf32>
    %26 = arith.subf %3, %25 : vector<16x32xf32>
    %cst_13 = arith.constant 9.99999974E-6 : f32
    %27 = vector.broadcast %cst_13 : f32 to vector<16x1xf32>
    %28 = arith.addf %24, %27 : vector<16x1xf32>
    %29 = math.rsqrt %28 : vector<16x1xf32>
    %30 = vector.broadcast %29 : vector<16x1xf32> to vector<16x32xf32>
    %31 = arith.mulf %26, %30 : vector<16x32xf32>
    %32 = vector.broadcast %11 : vector<1x32xf32> to vector<16x32xf32>
    %33 = arith.mulf %32, %31 : vector<16x32xf32>
    %34 = vector.broadcast %13 : vector<1x32xf32> to vector<16x32xf32>
    %35 = arith.addf %33, %34 : vector<16x32xf32>
    %36 = arith.truncf %35 : vector<16x32xf32> to vector<16x32xbf16>
    %c0_14 = arith.constant 0 : index
    %c0_15 = arith.constant 0 : index
    %c0_16 = arith.constant 0 : index
    %37 = vector.load %arg4[%c0_14, %c0_15, %c0_16] : memref<1x32x96xbf16, #tpu.memory_space<vmem>>, vector<1x32x96xbf16>
    %38 = vector.shape_cast %37 : vector<1x32x96xbf16> to vector<32x96xbf16>
    %cst_17 = arith.constant dense<0.000000e+00> : vector<16x96xf32>
    %39 = tpu.matmul %36, %38, %cst_17 {dimension_numbers = #tpu.dot_dimension_numbers<[1], [0], [0], [1], [0, 0, 1, 1], [], []>} : vector<16x32xbf16>, vector<32x96xbf16>, vector<16x96xf32> -> vector<16x96xf32>
    %40 = vector.extract_strided_slice %39 {offsets = [0, 0], sizes = [16, 32], strides = [1, 1]} : vector<16x96xf32> to vector<16x32xf32>
    %41 = vector.shape_cast %40 : vector<16x32xf32> to vector<16x4x8xf32>
    %42 = tpu.transpose %41, [1, 0, 2] : vector<16x4x8xf32> -> vector<4x16x8xf32>
    %43 = vector.shape_cast %42 : vector<4x16x8xf32> to vector<8x8x8xf32>
    %44 = arith.truncf %43 : vector<8x8x8xf32> to vector<8x8x8xbf16>
    %45 = vector.extract_strided_slice %39 {offsets = [0, 32], sizes = [16, 32], strides = [1, 1]} : vector<16x96xf32> to vector<16x32xf32>
    %46 = vector.shape_cast %45 : vector<16x32xf32> to vector<16x4x8xf32>
    %47 = tpu.transpose %46, [1, 0, 2] : vector<16x4x8xf32> -> vector<4x16x8xf32>
    %48 = vector.shape_cast %47 : vector<4x16x8xf32> to vector<8x8x8xf32>
    %49 = arith.truncf %48 : vector<8x8x8xf32> to vector<8x8x8xbf16>
    %50 = vector.extract_strided_slice %39 {offsets = [0, 64], sizes = [16, 32], strides = [1, 1]} : vector<16x96xf32> to vector<16x32xf32>
    %51 = vector.shape_cast %50 : vector<16x32xf32> to vector<16x4x8xf32>
    %52 = tpu.transpose %51, [1, 0, 2] : vector<16x4x8xf32> -> vector<4x16x8xf32>
    %53 = vector.shape_cast %52 : vector<4x16x8xf32> to vector<8x8x8xf32>
    %54 = arith.truncf %53 : vector<8x8x8xf32> to vector<8x8x8xbf16>
    "tpu.trace_start"() <{level = 10 : i32, message = "gqd,gkd->gqk"}> : () -> ()
    %cst_18 = arith.constant dense<0.000000e+00> : vector<8x8x8xf32>
    %55 = tpu.matmul %44, %49, %cst_18 {dimension_numbers = #tpu.dot_dimension_numbers<[2], [2], [1], [1], [0, 0, 0, 1, 1, 1], [0], [0]>} : vector<8x8x8xbf16>, vector<8x8x8xbf16>, vector<8x8x8xf32> -> vector<8x8x8xf32>
    "tpu.trace_stop"() : () -> ()
    %56 = vector.shape_cast %9 : vector<8x8xf32> to vector<1x8x8xf32>
    %57 = vector.broadcast %56 : vector<1x8x8xf32> to vector<8x8x8xf32>
    %58 = arith.addf %55, %57 : vector<8x8x8xf32>
    %cst_19 = arith.constant dense<0xFF800000> : vector<8x8xf32>
    %59 = vector.multi_reduction <maximumf>, %58, %cst_19 [2] : vector<8x8x8xf32> to vector<8x8xf32>
    %60 = vector.shape_cast %59 : vector<8x8xf32> to vector<8x8x1xf32>
    %61 = vector.broadcast %60 : vector<8x8x1xf32> to vector<8x8x8xf32>
    %62 = arith.subf %58, %61 : vector<8x8x8xf32>
    %63 = math.exp %62 : vector<8x8x8xf32>
    %cst_20 = arith.constant dense<0.000000e+00> : vector<8x8xf32>
    %64 = vector.multi_reduction <add>, %63, %cst_20 [2] : vector<8x8x8xf32> to vector<8x8xf32>
    %65 = vector.shape_cast %64 : vector<8x8xf32> to vector<8x8x1xf32>
    %66 = tpu.reciprocal %65 {approx = true} : vector<8x8x1xf32> -> vector<8x8x1xf32>
    %67 = vector.broadcast %66 : vector<8x8x1xf32> to vector<8x8x8xf32>
    %68 = arith.mulf %63, %67 : vector<8x8x8xf32>
    %69 = arith.truncf %68 : vector<8x8x8xf32> to vector<8x8x8xbf16>
    "tpu.trace_start"() <{level = 10 : i32, message = "gqk,gkd->gqd"}> : () -> ()
    %cst_21 = arith.constant dense<0.000000e+00> : vector<8x8x8xf32>
    %70 = tpu.matmul %69, %54, %cst_21 {dimension_numbers = #tpu.dot_dimension_numbers<[2], [1], [1], [2], [0, 0, 0, 1, 1, 2], [0], [0]>} : vector<8x8x8xbf16>, vector<8x8x8xbf16>, vector<8x8x8xf32> -> vector<8x8x8xf32>
    "tpu.trace_stop"() : () -> ()
    %71 = vector.shape_cast %70 : vector<8x8x8xf32> to vector<4x16x8xf32>
    %72 = tpu.transpose %71, [1, 0, 2] : vector<4x16x8xf32> -> vector<16x4x8xf32>
    %73 = vector.shape_cast %72 : vector<16x4x8xf32> to vector<16x32xf32>
    %74 = arith.truncf %73 : vector<16x32xf32> to vector<16x32xbf16>
    %c0_22 = arith.constant 0 : index
    %c0_23 = arith.constant 0 : index
    %c0_24 = arith.constant 0 : index
    %75 = vector.load %arg5[%c0_22, %c0_23, %c0_24] : memref<1x32x32xbf16, #tpu.memory_space<vmem>>, vector<1x32x32xbf16>
    %76 = vector.shape_cast %75 : vector<1x32x32xbf16> to vector<32x32xbf16>
    %cst_25 = arith.constant dense<0.000000e+00> : vector<16x32xf32>
    %77 = tpu.matmul %74, %76, %cst_25 {dimension_numbers = #tpu.dot_dimension_numbers<[1], [0], [0], [1], [0, 0, 1, 1], [], []>} : vector<16x32xbf16>, vector<32x32xbf16>, vector<16x32xf32> -> vector<16x32xf32>
    %c0_26 = arith.constant 0 : index
    %c0_27 = arith.constant 0 : index
    %c0_28 = arith.constant 0 : index
    %78 = vector.load %arg6[%c0_26, %c0_27, %c0_28] : memref<1x1x32xf32, #tpu.memory_space<vmem>>, vector<1x1x32xf32>
    %79 = vector.shape_cast %78 : vector<1x1x32xf32> to vector<1x32xf32>
    %80 = vector.broadcast %79 : vector<1x32xf32> to vector<16x32xf32>
    %81 = arith.addf %77, %80 : vector<16x32xf32>
    %82 = arith.addf %3, %81 : vector<16x32xf32>
    %c0_29 = arith.constant 0 : index
    %c0_30 = arith.constant 0 : index
    %c0_31 = arith.constant 0 : index
    %83 = vector.load %arg7[%c0_29, %c0_30, %c0_31] : memref<1x1x32xf32, #tpu.memory_space<vmem>>, vector<1x1x32xf32>
    %84 = vector.shape_cast %83 : vector<1x1x32xf32> to vector<1x32xf32>
    %c0_32 = arith.constant 0 : index
    %c0_33 = arith.constant 0 : index
    %c0_34 = arith.constant 0 : index
    %85 = vector.load %arg8[%c0_32, %c0_33, %c0_34] : memref<1x1x32xf32, #tpu.memory_space<vmem>>, vector<1x1x32xf32>
    %86 = vector.shape_cast %85 : vector<1x1x32xf32> to vector<1x32xf32>
    %cst_35 = arith.constant dense<0.000000e+00> : vector<16xf32>
    %87 = vector.multi_reduction <add>, %82, %cst_35 [1] : vector<16x32xf32> to vector<16xf32>
    %88 = vector.shape_cast %87 : vector<16xf32> to vector<16x1xf32>
    %cst_36 = arith.constant 3.200000e+01 : f32
    %89 = vector.broadcast %cst_36 : f32 to vector<16x1xf32>
    %90 = arith.divf %88, %89 : vector<16x1xf32>
    %91 = vector.broadcast %90 : vector<16x1xf32> to vector<16x32xf32>
    %92 = arith.subf %82, %91 : vector<16x32xf32>
    %93 = arith.mulf %92, %92 : vector<16x32xf32>
    %cst_37 = arith.constant dense<0.000000e+00> : vector<16xf32>
    %94 = vector.multi_reduction <add>, %93, %cst_37 [1] : vector<16x32xf32> to vector<16xf32>
    %95 = vector.shape_cast %94 : vector<16xf32> to vector<16x1xf32>
    %cst_38 = arith.constant 3.200000e+01 : f32
    %96 = vector.broadcast %cst_38 : f32 to vector<16x1xf32>
    %97 = arith.divf %95, %96 : vector<16x1xf32>
    %98 = vector.broadcast %90 : vector<16x1xf32> to vector<16x32xf32>
    %99 = arith.subf %82, %98 : vector<16x32xf32>
    %cst_39 = arith.constant 9.99999974E-6 : f32
    %100 = vector.broadcast %cst_39 : f32 to vector<16x1xf32>
    %101 = arith.addf %97, %100 : vector<16x1xf32>
    %102 = math.rsqrt %101 : vector<16x1xf32>
    %103 = vector.broadcast %102 : vector<16x1xf32> to vector<16x32xf32>
    %104 = arith.mulf %99, %103 : vector<16x32xf32>
    %105 = vector.broadcast %84 : vector<1x32xf32> to vector<16x32xf32>
    %106 = arith.mulf %105, %104 : vector<16x32xf32>
    %107 = vector.broadcast %86 : vector<1x32xf32> to vector<16x32xf32>
    %108 = arith.addf %106, %107 : vector<16x32xf32>
    %109 = arith.truncf %108 : vector<16x32xf32> to vector<16x32xbf16>
    %c0_40 = arith.constant 0 : index
    %c0_41 = arith.constant 0 : index
    %c0_42 = arith.constant 0 : index
    %110 = vector.load %arg9[%c0_40, %c0_41, %c0_42] : memref<1x32x128xbf16, #tpu.memory_space<vmem>>, vector<1x32x128xbf16>
    %111 = vector.shape_cast %110 : vector<1x32x128xbf16> to vector<32x128xbf16>
    %cst_43 = arith.constant dense<0.000000e+00> : vector<16x128xf32>
    %112 = tpu.matmul %109, %111, %cst_43 {dimension_numbers = #tpu.dot_dimension_numbers<[1], [0], [0], [1], [0, 0, 1, 1], [], []>} : vector<16x32xbf16>, vector<32x128xbf16>, vector<16x128xf32> -> vector<16x128xf32>
    %c0_44 = arith.constant 0 : index
    %c0_45 = arith.constant 0 : index
    %c0_46 = arith.constant 0 : index
    %113 = vector.load %arg10[%c0_44, %c0_45, %c0_46] : memref<1x1x128xf32, #tpu.memory_space<vmem>>, vector<1x1x128xf32>
    %114 = vector.shape_cast %113 : vector<1x1x128xf32> to vector<1x128xf32>
    %115 = vector.broadcast %114 : vector<1x128xf32> to vector<16x128xf32>
    %116 = arith.addf %112, %115 : vector<16x128xf32>
    %cst_47 = arith.constant 5.000000e-01 : f32
    %117 = vector.broadcast %cst_47 : f32 to vector<16x128xf32>
    %118 = arith.mulf %117, %116 : vector<16x128xf32>
    %119 = arith.mulf %116, %116 : vector<16x128xf32>
    %120 = arith.mulf %119, %116 : vector<16x128xf32>
    %cst_48 = arith.constant 4.471500e-02 : f32
    %121 = vector.broadcast %cst_48 : f32 to vector<16x128xf32>
    %122 = arith.mulf %121, %120 : vector<16x128xf32>
    %123 = arith.addf %116, %122 : vector<16x128xf32>
    %cst_49 = arith.constant 0.797884583 : f32
    %124 = vector.broadcast %cst_49 : f32 to vector<16x128xf32>
    %125 = arith.mulf %124, %123 : vector<16x128xf32>
    %126 = math.tanh %125 : vector<16x128xf32>
    %cst_50 = arith.constant 1.000000e+00 : f32
    %127 = vector.broadcast %cst_50 : f32 to vector<16x128xf32>
    %128 = arith.addf %127, %126 : vector<16x128xf32>
    %129 = arith.mulf %118, %128 : vector<16x128xf32>
    %130 = arith.truncf %129 : vector<16x128xf32> to vector<16x128xbf16>
    %c0_51 = arith.constant 0 : index
    %c0_52 = arith.constant 0 : index
    %c0_53 = arith.constant 0 : index
    %131 = vector.load %arg11[%c0_51, %c0_52, %c0_53] : memref<1x128x32xbf16, #tpu.memory_space<vmem>>, vector<1x128x32xbf16>
    %132 = vector.shape_cast %131 : vector<1x128x32xbf16> to vector<128x32xbf16>
    %cst_54 = arith.constant dense<0.000000e+00> : vector<16x32xf32>
    %133 = tpu.matmul %130, %132, %cst_54 {dimension_numbers = #tpu.dot_dimension_numbers<[1], [0], [0], [1], [0, 0, 1, 1], [], []>} : vector<16x128xbf16>, vector<128x32xbf16>, vector<16x32xf32> -> vector<16x32xf32>
    %c0_55 = arith.constant 0 : index
    %c0_56 = arith.constant 0 : index
    %c0_57 = arith.constant 0 : index
    %134 = vector.load %arg12[%c0_55, %c0_56, %c0_57] : memref<1x1x32xf32, #tpu.memory_space<vmem>>, vector<1x1x32xf32>
    %135 = vector.shape_cast %134 : vector<1x1x32xf32> to vector<1x32xf32>
    %136 = vector.broadcast %135 : vector<1x32xf32> to vector<16x32xf32>
    %137 = arith.addf %133, %136 : vector<16x32xf32>
    %138 = arith.addf %82, %137 : vector<16x32xf32>
    %c0_58 = arith.constant 0 : index
    %c0_59 = arith.constant 0 : index
    %139 = vector.load %arg15[%c0_58, %c0_59] : memref<16x32xf32, #tpu.memory_space<vmem>>, vector<16x32xf32>
    tpu.vector_store %arg15[%c0_58, %c0_59], %138 {strides = array<i32>} : memref<16x32xf32, #tpu.memory_space<vmem>>, vector<16x32xf32>,
    %c1_i32 = arith.constant 1 : i32
    %140 = arith.cmpi eq, %arg0, %c1_i32 : i32
    %141 = arith.extui %140 : i1 to i32
    %c0_i32_60 = arith.constant 0 : i32
    %142 = arith.cmpi ne, %141, %c0_i32_60 : i32
    scf.if %142 {
      %c0_61 = arith.constant 0 : index
      %c0_62 = arith.constant 0 : index
      %143 = vector.load %arg13[%c0_61, %c0_62] : memref<1x32xf32, #tpu.memory_space<vmem>>, vector<1x32xf32>
      %c0_63 = arith.constant 0 : index
      %c0_64 = arith.constant 0 : index
      %144 = vector.load %arg14[%c0_63, %c0_64] : memref<1x32xf32, #tpu.memory_space<vmem>>, vector<1x32xf32>
      %cst_65 = arith.constant dense<0.000000e+00> : vector<16xf32>
      %145 = vector.multi_reduction <add>, %138, %cst_65 [1] : vector<16x32xf32> to vector<16xf32>
      %146 = vector.shape_cast %145 : vector<16xf32> to vector<16x1xf32>
      %cst_66 = arith.constant 3.200000e+01 : f32
      %147 = vector.broadcast %cst_66 : f32 to vector<16x1xf32>
      %148 = arith.divf %146, %147 : vector<16x1xf32>
      %149 = vector.broadcast %148 : vector<16x1xf32> to vector<16x32xf32>
      %150 = arith.subf %138, %149 : vector<16x32xf32>
      %151 = arith.mulf %150, %150 : vector<16x32xf32>
      %cst_67 = arith.constant dense<0.000000e+00> : vector<16xf32>
      %152 = vector.multi_reduction <add>, %151, %cst_67 [1] : vector<16x32xf32> to vector<16xf32>
      %153 = vector.shape_cast %152 : vector<16xf32> to vector<16x1xf32>
      %cst_68 = arith.constant 3.200000e+01 : f32
      %154 = vector.broadcast %cst_68 : f32 to vector<16x1xf32>
      %155 = arith.divf %153, %154 : vector<16x1xf32>
      %156 = vector.broadcast %148 : vector<16x1xf32> to vector<16x32xf32>
      %157 = arith.subf %138, %156 : vector<16x32xf32>
      %cst_69 = arith.constant 9.99999974E-6 : f32
      %158 = vector.broadcast %cst_69 : f32 to vector<16x1xf32>
      %159 = arith.addf %155, %158 : vector<16x1xf32>
      %160 = math.rsqrt %159 : vector<16x1xf32>
      %161 = vector.broadcast %160 : vector<16x1xf32> to vector<16x32xf32>
      %162 = arith.mulf %157, %161 : vector<16x32xf32>
      %163 = vector.broadcast %143 : vector<1x32xf32> to vector<16x32xf32>
      %164 = arith.mulf %163, %162 : vector<16x32xf32>
      %165 = vector.broadcast %144 : vector<1x32xf32> to vector<16x32xf32>
      %166 = arith.addf %164, %165 : vector<16x32xf32>
      %c0_70 = arith.constant 0 : index
      %c0_71 = arith.constant 0 : index
      %167 = vector.load %arg15[%c0_70, %c0_71] : memref<16x32xf32, #tpu.memory_space<vmem>>, vector<16x32xf32>
      tpu.vector_store %arg15[%c0_70, %c0_71], %166 {strides = array<i32>} : memref<16x32xf32, #tpu.memory_space<vmem>>, vector<16x32xf32>,
    } else {
    }
    return
  }
  func.func @transform_0(%arg0: i32) -> (i32, i32) {
    %c0_i32 = arith.constant 0 : i32
    %c0_i32_0 = arith.constant 0 : i32
    %c0_i32_1 = arith.constant 0 : i32
    return %c0_i32, %c0_i32_0 : i32, i32
  }
  func.func @transform_1(%arg0: i32) -> (i32, i32, i32) {
    %c0_i32 = arith.constant 0 : i32
    %c0_i32_0 = arith.constant 0 : i32
    %c0_i32_1 = arith.constant 0 : i32
    return %arg0, %c0_i32, %c0_i32_0 : i32, i32, i32
  }
  func.func @transform_2(%arg0: i32) -> (i32, i32, i32) {
    %c0_i32 = arith.constant 0 : i32
    %c0_i32_0 = arith.constant 0 : i32
    %c0_i32_1 = arith.constant 0 : i32
    return %arg0, %c0_i32, %c0_i32_0 : i32, i32, i32
  }
  func.func @transform_3(%arg0: i32) -> (i32, i32, i32) {
    %c0_i32 = arith.constant 0 : i32
    %c0_i32_0 = arith.constant 0 : i32
    %c0_i32_1 = arith.constant 0 : i32
    return %arg0, %c0_i32, %c0_i32_0 : i32, i32, i32
  }
  func.func @transform_4(%arg0: i32) -> (i32, i32, i32) {
    %c0_i32 = arith.constant 0 : i32
    %c0_i32_0 = arith.constant 0 : i32
    %c0_i32_1 = arith.constant 0 : i32
    return %arg0, %c0_i32, %c0_i32_0 : i32, i32, i32
  }
  func.func @transform_5(%arg0: i32) -> (i32, i32, i32) {
    %c0_i32 = arith.constant 0 : i32
    %c0_i32_0 = arith.constant 0 : i32
    %c0_i32_1 = arith.constant 0 : i32
    return %arg0, %c0_i32, %c0_i32_0 : i32, i32, i32
  }
  func.func @transform_6(%arg0: i32) -> (i32, i32, i32) {
    %c0_i32 = arith.constant 0 : i32
    %c0_i32_0 = arith.constant 0 : i32
    %c0_i32_1 = arith.constant 0 : i32
    return %arg0, %c0_i32, %c0_i32_0 : i32, i32, i32
  }
  func.func @transform_7(%arg0: i32) -> (i32, i32, i32) {
    %c0_i32 = arith.constant 0 : i32
    %c0_i32_0 = arith.constant 0 : i32
    %c0_i32_1 = arith.constant 0 : i32
    return %arg0, %c0_i32, %c0_i32_0 : i32, i32, i32
  }
  func.func @transform_8(%arg0: i32) -> (i32, i32, i32) {
    %c0_i32 = arith.constant 0 : i32
    %c0_i32_0 = arith.constant 0 : i32
    %c0_i32_1 = arith.constant 0 : i32
    return %arg0, %c0_i32, %c0_i32_0 : i32, i32, i32
  }
  func.func @transform_9(%arg0: i32) -> (i32, i32, i32) {
    %c0_i32 = arith.constant 0 : i32
    %c0_i32_0 = arith.constant 0 : i32
    %c0_i32_1 = arith.constant 0 : i32
    return %arg0, %c0_i32, %c0_i32_0 : i32, i32, i32
  }
  func.func @transform_10(%arg0: i32) -> (i32, i32, i32) {
    %c0_i32 = arith.constant 0 : i32
    %c0_i32_0 = arith.constant 0 : i32
    %c0_i32_1 = arith.constant 0 : i32
    return %arg0, %c0_i32, %c0_i32_0 : i32, i32, i32
  }
  func.func @transform_11(%arg0: i32) -> (i32, i32, i32) {
    %c0_i32 = arith.constant 0 : i32
    %c0_i32_0 = arith.constant 0 : i32
    %c0_i32_1 = arith.constant 0 : i32
    return %arg0, %c0_i32, %c0_i32_0 : i32, i32, i32
  }
  func.func @transform_12(%arg0: i32) -> (i32, i32) {
    %c0_i32 = arith.constant 0 : i32
    %c0_i32_0 = arith.constant 0 : i32
    %c0_i32_1 = arith.constant 0 : i32
    return %c0_i32, %c0_i32_0 : i32, i32
  }
  func.func @transform_13(%arg0: i32) -> (i32, i32) {
    %c0_i32 = arith.constant 0 : i32
    %c0_i32_0 = arith.constant 0 : i32
    %c0_i32_1 = arith.constant 0 : i32
    return %c0_i32, %c0_i32_0 : i32, i32
  }
  func.func @transform_14(%arg0: i32) -> (i32, i32) {
    %c0_i32 = arith.constant 0 : i32
    %c0_i32_0 = arith.constant 0 : i32
    %c0_i32_1 = arith.constant 0 : i32
    return %c0_i32, %c0_i32_0 : i32, i32
  }
}

</mosaic_0001>

<llo_original>
// kernel: gpt_forward.3
$region0: #{gpt_forward.3}
  #allocation0 [shape = 'u32[]', space=smem, size = 0x4, offset = 0x4, fixed_abs, tag = 'smem constant byte address 0x4 - core index']
  #allocation1 [shape = 'u32[72,128]{1,0:T(1,128)}', space=vmem, size = 0x9000, scoped, tag = 'internal scratch']
  %s0 = inlined_call_operand.vmem [shape: f32[16,32], index: 0, kind: input, shape index: {}]
  %s1 = inlined_call_operand.vmem [shape: bf16[32,128], index: 1, kind: input, shape index: {}]
  %s2 = inlined_call_operand.hbm [shape: f32[16,128], index: 2, kind: output, shape index: {}]
  %s3 = sld [smem:[#allocation0]]
  $region18: #{gpt_forward.3} parent=0
    _
  %s5 = ssub.s32 1, %s3
  %s6 = scalar_select 0, %s5, %s3
  $region1: #{gpt_forward.3} parent=0
    #allocation2 [shape = 'u8[8192]{0}', space=vmem, size = 0x2000, scoped, tag = 'output window, operand 0, single buffered']
    #allocation3 [shape = 's32[1]{0}', space=sflag, size = 0x4, scoped, tag = 'scoped memory for gpt_forward.3']
    %7 = vsyncpa [#allocation3], 0
    // Predicated region
    $region2: #{gpt_forward.3} parent=1 // pred_check
      _
    $region3: #{gpt_forward.3} parent=1 // pred_check_branch
      %9 = sbr.rel (0) target = $region5
    $region4: #{gpt_forward.3} parent=1 // pred_region
      _
    $region5: #{gpt_forward.3} parent=1 // pred_fallthru
      _
    // Predicated region
    $region6: #{gpt_forward.3} parent=1 // pred_check
      _
    $region7: #{gpt_forward.3} parent=1 // pred_check_branch
      %11 = sbr.rel (0) target = $region9
    $region8: #{gpt_forward.3} parent=1 // pred_region
      _
    $region9: #{gpt_forward.3} parent=1 // pred_fallthru
      _
    %v13 = vld [vmem:[%s0] sm:$0xff]
    %v14 = vld [vmem:[%s0 + $0x8] sm:$0xff]
    %v15 = vpack.c.bf16 %v14, %v13
    %v16 = vld [vmem:[%s1] sm:$0xf]
    %v17 = vld [vmem:[%s1 + $0x4] sm:$0xf]
    %v18 = vld [vmem:[%s1 + $0x8] sm:$0xf]
    %v19 = vld [vmem:[%s1 + $0xc] sm:$0xf]
    %v24 = vunpack.c.l.b16 %v16
    %v25 = vunpack.c.l.b16 %v17
    %v26 = vunpack.c.l.b16 %v18
    %v27 = vunpack.c.l.b16 %v19
    %v28 = vpack.c.b16 %v25, %v24
    %v29 = vpack.c.b16 %v27, %v26
    %vm32 = vcmask 261120
    %v34 = vsel %vm32, %v15, 0
    %36 = vmatpush.bf16.msra.mxu0 0
    %37 = vmatpush.bf16.msra.mxu0 0
    %38 = vmatpush.bf16.msra.mxu0 0
    %39 = vmatpush.bf16.msra.mxu0 0
    %40 = vmatpush.bf16.msra.mxu0 0
    %41 = vmatpush.bf16.msra.mxu0 0
    %42 = vmatpush.bf16.msra.mxu0 %v29
    %43 = vmatpush.bf16.msra.mxu0 %v28
    %44 = vmatmul.bf16.gmra.mxu0 %v34
    %v45 = vpop.f32.mrf.mxu0
    %v46 = vadd.f32 0.0, %v45
    %v47 = vpop.f32.mrf.mxu0
    %v48 = vadd.f32 0.0, %v47
    %49 = vdwg.mxu0
    %50 = vst [vmem:[#allocation2] sm:$0xff] %v46
    %51 = vst [vmem:[#allocation2 + $0x8] sm:$0xff] %v48
    // Predicated region
    $region10: #{gpt_forward.3} parent=1 // pred_check
      _
    $region11: #{gpt_forward.3} parent=1 // pred_check_branch
      %53 = sbr.rel (0) target = $region13
    $region12: #{gpt_forward.3} parent=1 // pred_region
      %55 = vsyncadd [#allocation3], 0
      %s56 = sshll.u32 [#allocation2], 4
      %s57 = int_to_ptr.vmem [resolvable:$true] %s56
      %s58 = sshll.u32 %s2, 4
      %s59 = int_to_ptr.hbm [resolvable:$true] %s58
      %64 = dma.vmem_to_hbm [thread:$0]  %s57, 256, %s59, [#allocation3], 128, 128, 8
    $region13: #{gpt_forward.3} parent=1 // pred_fallthru
      _
    // Predicated region
    $region14: #{gpt_forward.3} parent=1 // pred_check
      _
    $region15: #{gpt_forward.3} parent=1 // pred_check_branch
      %66 = sbr.rel (0) target = $region17
    $region16: #{gpt_forward.3} parent=1 // pred_region
      %68 = dma.done [#allocation3], 256
    $region17: #{gpt_forward.3} parent=1 // pred_fallthru
      _
    %69 = vsyncpa [#allocation3], 1

// kernel: gpt_forward.2
$region0: #{gpt_forward.2}
  #allocation0 [shape = 'u32[]', space=smem, size = 0x4, offset = 0x4, fixed_abs, tag = 'smem constant byte address 0x4 - core index']
  #allocation1 [shape = 'u32[72,128]{1,0:T(1,128)}', space=vmem, size = 0x9000, scoped, tag = 'internal scratch']
  %s0 = inlined_call_operand.vmem [shape: f32[16,32], index: 0, kind: input, shape index: {}]
  %s1 = inlined_call_operand.vmem [shape: f32[2,1,32], index: 1, kind: input, shape index: {}]
  %s2 = inlined_call_operand.vmem [shape: f32[2,1,32], index: 2, kind: input, shape index: {}]
  %s3 = inlined_call_operand.vmem [shape: bf16[2,32,96], index: 3, kind: input, shape index: {}]
  %s4 = inlined_call_operand.vmem [shape: bf16[2,32,32], index: 4, kind: input, shape index: {}]
  %s5 = inlined_call_operand.vmem [shape: f32[2,1,32], index: 5, kind: input, shape index: {}]
  %s6 = inlined_call_operand.vmem [shape: f32[2,1,32], index: 6, kind: input, shape index: {}]
  %s7 = inlined_call_operand.vmem [shape: f32[2,1,32], index: 7, kind: input, shape index: {}]
  %s8 = inlined_call_operand.vmem [shape: bf16[2,32,128], index: 8, kind: input, shape index: {}]
  %s9 = inlined_call_operand.vmem [shape: f32[2,1,128], index: 9, kind: input, shape index: {}]
  %s10 = inlined_call_operand.vmem [shape: bf16[2,128,32], index: 10, kind: input, shape index: {}]
  %s11 = inlined_call_operand.vmem [shape: f32[2,1,32], index: 11, kind: input, shape index: {}]
  %s12 = inlined_call_operand.vmem [shape: f32[1,32], index: 12, kind: input, shape index: {}]
  %s13 = inlined_call_operand.vmem [shape: f32[1,32], index: 13, kind: input, shape index: {}]
  %s14 = inlined_call_operand.vmem [shape: f32[16,32], index: 14, kind: output, shape index: {}]
  %s15 = sld [smem:[#allocation0]]
  $region97: #{gpt_forward.2} parent=0
    _
  %s17 = ssub.s32 1, %s15
  %s18 = scalar_select 0, %s17, %s15
  loop: start=0, step=1, limit=4
  $region2: #{gpt_forward.2} parent=0 // loop_pre_header
    _
  $region3: #{gpt_forward.2} parent=0 // loop_header
    %s20 = sphi 0, %s24
    %p21 = scmp.ge.s32.totalorder %s20, 4
    %s28 = sphi 0, %s28
    %s30 = sphi 0, %s28
    %s31 = sphi 0, %s30
    %s45 = sphi 0, %s31
    %s51 = sphi 0, %s53
    %s54 = sphi 0, %s51
    %s55 = sphi 0, %s54
    %s71 = sphi 0, %s55
    %s77 = sphi 0, %s79
    %s80 = sphi 0, %s77
    %s81 = sphi 0, %s80
    %s97 = sphi 0, %s81
    %s103 = sphi 0, %s105
    %s106 = sphi 0, %s103
    %s107 = sphi 0, %s106
    %s123 = sphi 0, %s107
    %s129 = sphi 0, %s131
    %s132 = sphi 0, %s129
    %s133 = sphi 0, %s132
    %s149 = sphi 0, %s133
    %s155 = sphi 0, %s157
    %s158 = sphi 0, %s155
    %s159 = sphi 0, %s158
    %s175 = sphi 0, %s159
    %s181 = sphi 0, %s183
    %s184 = sphi 0, %s181
    %s185 = sphi 0, %s184
    %s201 = sphi 0, %s185
    %s207 = sphi 0, %s209
    %s210 = sphi 0, %s207
    %s211 = sphi 0, %s210
    %s227 = sphi 0, %s211
    %s233 = sphi 0, %s235
    %s236 = sphi 0, %s233
    %s237 = sphi 0, %s236
    %s253 = sphi 0, %s237
    %s259 = sphi 0, %s261
    %s262 = sphi 0, %s259
    %s263 = sphi 0, %s262
    %s279 = sphi 0, %s263
    %s285 = sphi 0, %s287
    %s288 = sphi 0, %s285
    %s289 = sphi 0, %s288
    %s305 = sphi 0, %s289
    %s311 = sphi 0, %s313
    %s314 = sphi 0, %s311
    %s315 = sphi 0, %s314
    %s331 = sphi 0, %s315
    %s335 = sphi 0, %s335
    %s337 = sphi 0, %s335
    %s338 = sphi 0, %s337
    %s352 = sphi 0, %s338
    %s356 = sphi 0, %s356
    %s358 = sphi 0, %s356
    %s359 = sphi 0, %s358
    %s373 = sphi 0, %s359
    %s377 = sphi 0, %s377
    %s379 = sphi 0, %s377
    %s380 = sphi 0, %s379
    %s394 = sphi 0, %s380
  $region4: #{gpt_forward.2} parent=0 // loop_header_branch
    %23 = sbr.rel (%p21) target = $region8
  $region5: #{gpt_forward.2} parent=0 // loop_body
    %s25 = ssub.s32 %s20, 1
    %s26 = ssub.s32 %s20, 2
    %s27 = sadd.s32 %s20, 1
    %s29 = sadd.s32 %s28, 1
    %p32 = scmp.eq.s32.totalorder %s20, 1
    %p33 = scmp.ne.s32.totalorder %s28, %s30
    %p34 = scmp.eq.s32.totalorder %s20, 0
    %p35 = por %p33, %p34
    %p36 = scmp.ne.s32.totalorder %s28, %s30
    %p37 = scmp.eq.s32.totalorder %s25, 1
    %p38 = por %p36, %p37
    %p39 = scmp.ne.s32.totalorder %s30, %s31
    %p40 = scmp.eq.s32.totalorder %s25, 0
    %p41 = por %p39, %p40
    %p42 = scmp.ne.s32.totalorder %s30, %s31
    %p43 = scmp.eq.s32.totalorder %s26, 1
    %p44 = por %p42, %p43
    %p46 = scmp.ne.s32.totalorder %s31, %s45
    %p47 = scmp.eq.s32.totalorder %s26, 0
    %p48 = por %p46, %p47
    %s49 = ssub.s32 %s20, %s27
    %p50 = scmp.eq.s32.totalorder %s49, 0
    %s52 = sadd.s32 %s51, 1
    %s53 = scalar_select %p50, %s51, %s52
    %p56 = pneg %p50
    %p57 = scmp.eq.s32.totalorder %s20, 1
    %p58 = por %p56, %p57
    %p59 = scmp.ne.s32.totalorder %s51, %s54
    %p60 = scmp.eq.s32.totalorder %s20, 0
    %p61 = por %p59, %p60
    %p62 = scmp.ne.s32.totalorder %s51, %s54
    %p63 = scmp.eq.s32.totalorder %s25, 1
    %p64 = por %p62, %p63
    %p65 = scmp.ne.s32.totalorder %s54, %s55
    %p66 = scmp.eq.s32.totalorder %s25, 0
    %p67 = por %p65, %p66
    %p68 = scmp.ne.s32.totalorder %s54, %s55
    %p69 = scmp.eq.s32.totalorder %s26, 1
    %p70 = por %p68, %p69
    %p72 = scmp.ne.s32.totalorder %s55, %s71
    %p73 = scmp.eq.s32.totalorder %s26, 0
    %p74 = por %p72, %p73
    %s75 = ssub.s32 %s20, %s27
    %p76 = scmp.eq.s32.totalorder %s75, 0
    %s78 = sadd.s32 %s77, 1
    %s79 = scalar_select %p76, %s77, %s78
    %p82 = pneg %p76
    %p83 = scmp.eq.s32.totalorder %s20, 1
    %p84 = por %p82, %p83
    %p85 = scmp.ne.s32.totalorder %s77, %s80
    %p86 = scmp.eq.s32.totalorder %s20, 0
    %p87 = por %p85, %p86
    %p88 = scmp.ne.s32.totalorder %s77, %s80
    %p89 = scmp.eq.s32.totalorder %s25, 1
    %p90 = por %p88, %p89
    %p91 = scmp.ne.s32.totalorder %s80, %s81
    %p92 = scmp.eq.s32.totalorder %s25, 0
    %p93 = por %p91, %p92
    %p94 = scmp.ne.s32.totalorder %s80, %s81
    %p95 = scmp.eq.s32.totalorder %s26, 1
    %p96 = por %p94, %p95
    %p98 = scmp.ne.s32.totalorder %s81, %s97
    %p99 = scmp.eq.s32.totalorder %s26, 0
    %p100 = por %p98, %p99
    %s101 = ssub.s32 %s20, %s27
    %p102 = scmp.eq.s32.totalorder %s101, 0
    %s104 = sadd.s32 %s103, 1
    %s105 = scalar_select %p102, %s103, %s104
    %p108 = pneg %p102
    %p109 = scmp.eq.s32.totalorder %s20, 1
    %p110 = por %p108, %p109
    %p111 = scmp.ne.s32.totalorder %s103, %s106
    %p112 = scmp.eq.s32.totalorder %s20, 0
    %p113 = por %p111, %p112
    %p114 = scmp.ne.s32.totalorder %s103, %s106
    %p115 = scmp.eq.s32.totalorder %s25, 1
    %p116 = por %p114, %p115
    %p117 = scmp.ne.s32.totalorder %s106, %s107
    %p118 = scmp.eq.s32.totalorder %s25, 0
    %p119 = por %p117, %p118
    %p120 = scmp.ne.s32.totalorder %s106, %s107
    %p121 = scmp.eq.s32.totalorder %s26, 1
    %p122 = por %p120, %p121
    %p124 = scmp.ne.s32.totalorder %s107, %s123
    %p125 = scmp.eq.s32.totalorder %s26, 0
    %p126 = por %p124, %p125
    %s127 = ssub.s32 %s20, %s27
    %p128 = scmp.eq.s32.totalorder %s127, 0
    %s130 = sadd.s32 %s129, 1
    %s131 = scalar_select %p128, %s129, %s130
    %p134 = pneg %p128
    %p135 = scmp.eq.s32.totalorder %s20, 1
    %p136 = por %p134, %p135
    %p137 = scmp.ne.s32.totalorder %s129, %s132
    %p138 = scmp.eq.s32.totalorder %s20, 0
    %p139 = por %p137, %p138
    %p140 = scmp.ne.s32.totalorder %s129, %s132
    %p141 = scmp.eq.s32.totalorder %s25, 1
    %p142 = por %p140, %p141
    %p143 = scmp.ne.s32.totalorder %s132, %s133
    %p144 = scmp.eq.s32.totalorder %s25, 0
    %p145 = por %p143, %p144
    %p146 = scmp.ne.s32.totalorder %s132, %s133
    %p147 = scmp.eq.s32.totalorder %s26, 1
    %p148 = por %p146, %p147
    %p150 = scmp.ne.s32.totalorder %s133, %s149
    %p151 = scmp.eq.s32.totalorder %s26, 0
    %p152 = por %p150, %p151
    %s153 = ssub.s32 %s20, %s27
    %p154 = scmp.eq.s32.totalorder %s153, 0
    %s156 = sadd.s32 %s155, 1
    %s157 = scalar_select %p154, %s155, %s156
    %p160 = pneg %p154
    %p161 = scmp.eq.s32.totalorder %s20, 1
    %p162 = por %p160, %p161
    %p163 = scmp.ne.s32.totalorder %s155, %s158
    %p164 = scmp.eq.s32.totalorder %s20, 0
    %p165 = por %p163, %p164
    %p166 = scmp.ne.s32.totalorder %s155, %s158
    %p167 = scmp.eq.s32.totalorder %s25, 1
    %p168 = por %p166, %p167
    %p169 = scmp.ne.s32.totalorder %s158, %s159
    %p170 = scmp.eq.s32.totalorder %s25, 0
    %p171 = por %p169, %p170
    %p172 = scmp.ne.s32.totalorder %s158, %s159
    %p173 = scmp.eq.s32.totalorder %s26, 1
    %p174 = por %p172, %p173
    %p176 = scmp.ne.s32.totalorder %s159, %s175
    %p177 = scmp.eq.s32.totalorder %s26, 0
    %p178 = por %p176, %p177
    %s179 = ssub.s32 %s20, %s27
    %p180 = scmp.eq.s32.totalorder %s179, 0
    %s182 = sadd.s32 %s181, 1
    %s183 = scalar_select %p180, %s181, %s182
    %p186 = pneg %p180
    %p187 = scmp.eq.s32.totalorder %s20, 1
    %p188 = por %p186, %p187
    %p189 = scmp.ne.s32.totalorder %s181, %s184
    %p190 = scmp.eq.s32.totalorder %s20, 0
    %p191 = por %p189, %p190
    %p192 = scmp.ne.s32.totalorder %s181, %s184
    %p193 = scmp.eq.s32.totalorder %s25, 1
    %p194 = por %p192, %p193
    %p195 = scmp.ne.s32.totalorder %s184, %s185
    %p196 = scmp.eq.s32.totalorder %s25, 0
    %p197 = por %p195, %p196
    %p198 = scmp.ne.s32.totalorder %s184, %s185
    %p199 = scmp.eq.s32.totalorder %s26, 1
    %p200 = por %p198, %p199
    %p202 = scmp.ne.s32.totalorder %s185, %s201
    %p203 = scmp.eq.s32.totalorder %s26, 0
    %p204 = por %p202, %p203
    %s205 = ssub.s32 %s20, %s27
    %p206 = scmp.eq.s32.totalorder %s205, 0
    %s208 = sadd.s32 %s207, 1
    %s209 = scalar_select %p206, %s207, %s208
    %p212 = pneg %p206
    %p213 = scmp.eq.s32.totalorder %s20, 1
    %p214 = por %p212, %p213
    %p215 = scmp.ne.s32.totalorder %s207, %s210
    %p216 = scmp.eq.s32.totalorder %s20, 0
    %p217 = por %p215, %p216
    %p218 = scmp.ne.s32.totalorder %s207, %s210
    %p219 = scmp.eq.s32.totalorder %s25, 1
    %p220 = por %p218, %p219
    %p221 = scmp.ne.s32.totalorder %s210, %s211
    %p222 = scmp.eq.s32.totalorder %s25, 0
    %p223 = por %p221, %p222
    %p224 = scmp.ne.s32.totalorder %s210, %s211
    %p225 = scmp.eq.s32.totalorder %s26, 1
    %p226 = por %p224, %p225
    %p228 = scmp.ne.s32.totalorder %s211, %s227
    %p229 = scmp.eq.s32.totalorder %s26, 0
    %p230 = por %p228, %p229
    %s231 = ssub.s32 %s20, %s27
    %p232 = scmp.eq.s32.totalorder %s231, 0
    %s234 = sadd.s32 %s233, 1
    %s235 = scalar_select %p232, %s233, %s234
    %p238 = pneg %p232
    %p239 = scmp.eq.s32.totalorder %s20, 1
    %p240 = por %p238, %p239
    %p241 = scmp.ne.s32.totalorder %s233, %s236
    %p242 = scmp.eq.s32.totalorder %s20, 0
    %p243 = por %p241, %p242
    %p244 = scmp.ne.s32.totalorder %s233, %s236
    %p245 = scmp.eq.s32.totalorder %s25, 1
    %p246 = por %p244, %p245
    %p247 = scmp.ne.s32.totalorder %s236, %s237
    %p248 = scmp.eq.s32.totalorder %s25, 0
    %p249 = por %p247, %p248
    %p250 = scmp.ne.s32.totalorder %s236, %s237
    %p251 = scmp.eq.s32.totalorder %s26, 1
    %p252 = por %p250, %p251
    %p254 = scmp.ne.s32.totalorder %s237, %s253
    %p255 = scmp.eq.s32.totalorder %s26, 0
    %p256 = por %p254, %p255
    %s257 = ssub.s32 %s20, %s27
    %p258 = scmp.eq.s32.totalorder %s257, 0
    %s260 = sadd.s32 %s259, 1
    %s261 = scalar_select %p258, %s259, %s260
    %p264 = pneg %p258
    %p265 = scmp.eq.s32.totalorder %s20, 1
    %p266 = por %p264, %p265
    %p267 = scmp.ne.s32.totalorder %s259, %s262
    %p268 = scmp.eq.s32.totalorder %s20, 0
    %p269 = por %p267, %p268
    %p270 = scmp.ne.s32.totalorder %s259, %s262
    %p271 = scmp.eq.s32.totalorder %s25, 1
    %p272 = por %p270, %p271
    %p273 = scmp.ne.s32.totalorder %s262, %s263
    %p274 = scmp.eq.s32.totalorder %s25, 0
    %p275 = por %p273, %p274
    %p276 = scmp.ne.s32.totalorder %s262, %s263
    %p277 = scmp.eq.s32.totalorder %s26, 1
    %p278 = por %p276, %p277
    %p280 = scmp.ne.s32.totalorder %s263, %s279
    %p281 = scmp.eq.s32.totalorder %s26, 0
    %p282 = por %p280, %p281
    %s283 = ssub.s32 %s20, %s27
    %p284 = scmp.eq.s32.totalorder %s283, 0
    %s286 = sadd.s32 %s285, 1
    %s287 = scalar_select %p284, %s285, %s286
    %p290 = pneg %p284
    %p291 = scmp.eq.s32.totalorder %s20, 1
    %p292 = por %p290, %p291
    %p293 = scmp.ne.s32.totalorder %s285, %s288
    %p294 = scmp.eq.s32.totalorder %s20, 0
    %p295 = por %p293, %p294
    %p296 = scmp.ne.s32.totalorder %s285, %s288
    %p297 = scmp.eq.s32.totalorder %s25, 1
    %p298 = por %p296, %p297
    %p299 = scmp.ne.s32.totalorder %s288, %s289
    %p300 = scmp.eq.s32.totalorder %s25, 0
    %p301 = por %p299, %p300
    %p302 = scmp.ne.s32.totalorder %s288, %s289
    %p303 = scmp.eq.s32.totalorder %s26, 1
    %p304 = por %p302, %p303
    %p306 = scmp.ne.s32.totalorder %s289, %s305
    %p307 = scmp.eq.s32.totalorder %s26, 0
    %p308 = por %p306, %p307
    %s309 = ssub.s32 %s20, %s27
    %p310 = scmp.eq.s32.totalorder %s309, 0
    %s312 = sadd.s32 %s311, 1
    %s313 = scalar_select %p310, %s311, %s312
    %p316 = pneg %p310
    %p317 = scmp.eq.s32.totalorder %s20, 1
    %p318 = por %p316, %p317
    %p319 = scmp.ne.s32.totalorder %s311, %s314
    %p320 = scmp.eq.s32.totalorder %s20, 0
    %p321 = por %p319, %p320
    %p322 = scmp.ne.s32.totalorder %s311, %s314
    %p323 = scmp.eq.s32.totalorder %s25, 1
    %p324 = por %p322, %p323
    %p325 = scmp.ne.s32.totalorder %s314, %s315
    %p326 = scmp.eq.s32.totalorder %s25, 0
    %p327 = por %p325, %p326
    %p328 = scmp.ne.s32.totalorder %s314, %s315
    %p329 = scmp.eq.s32.totalorder %s26, 1
    %p330 = por %p328, %p329
    %p332 = scmp.ne.s32.totalorder %s315, %s331
    %p333 = scmp.eq.s32.totalorder %s26, 0
    %p334 = por %p332, %p333
    %s336 = sadd.s32 %s335, 1
    %p339 = scmp.eq.s32.totalorder %s20, 1
    %p340 = scmp.ne.s32.totalorder %s335, %s337
    %p341 = scmp.eq.s32.totalorder %s20, 0
    %p342 = por %p340, %p341
    %p343 = scmp.ne.s32.totalorder %s335, %s337
    %p344 = scmp.eq.s32.totalorder %s25, 1
    %p345 = por %p343, %p344
    %p346 = scmp.ne.s32.totalorder %s337, %s338
    %p347 = scmp.eq.s32.totalorder %s25, 0
    %p348 = por %p346, %p347
    %p349 = scmp.ne.s32.totalorder %s337, %s338
    %p350 = scmp.eq.s32.totalorder %s26, 1
    %p351 = por %p349, %p350
    %p353 = scmp.ne.s32.totalorder %s338, %s352
    %p354 = scmp.eq.s32.totalorder %s26, 0
    %p355 = por %p353, %p354
    %s357 = sadd.s32 %s356, 1
    %p360 = scmp.eq.s32.totalorder %s20, 1
    %p361 = scmp.ne.s32.totalorder %s356, %s358
    %p362 = scmp.eq.s32.totalorder %s20, 0
    %p363 = por %p361, %p362
    %p364 = scmp.ne.s32.totalorder %s356, %s358
    %p365 = scmp.eq.s32.totalorder %s25, 1
    %p366 = por %p364, %p365
    %p367 = scmp.ne.s32.totalorder %s358, %s359
    %p368 = scmp.eq.s32.totalorder %s25, 0
    %p369 = por %p367, %p368
    %p370 = scmp.ne.s32.totalorder %s358, %s359
    %p371 = scmp.eq.s32.totalorder %s26, 1
    %p372 = por %p370, %p371
    %p374 = scmp.ne.s32.totalorder %s359, %s373
    %p375 = scmp.eq.s32.totalorder %s26, 0
    %p376 = por %p374, %p375
    %s378 = sadd.s32 %s377, 1
    %p381 = scmp.eq.s32.totalorder %s20, 1
    %p382 = scmp.ne.s32.totalorder %s377, %s379
    %p383 = scmp.eq.s32.totalorder %s20, 0
    %p384 = por %p382, %p383
    %p385 = scmp.ne.s32.totalorder %s377, %s379
    %p386 = scmp.eq.s32.totalorder %s25, 1
    %p387 = por %p385, %p386
    %p388 = scmp.ne.s32.totalorder %s379, %s380
    %p389 = scmp.eq.s32.totalorder %s25, 0
    %p390 = por %p388, %p389
    %p391 = scmp.ne.s32.totalorder %s379, %s380
    %p392 = scmp.eq.s32.totalorder %s26, 1
    %p393 = por %p391, %p392
    %p395 = scmp.ne.s32.totalorder %s380, %s394
    %p396 = scmp.eq.s32.totalorder %s26, 0
    %p397 = por %p395, %p396
    %p398 = scmp.le.s32.totalorder 1, %s20
    %p399 = scmp.lt.s32.totalorder %s20, 3
    %p400 = pnand %p398, %p399
    %p401 = pneg %p400
    // Predicated region
    $region9: #{gpt_forward.2} parent=5 // pred_check
      _
    $region10: #{gpt_forward.2} parent=5 // pred_check_branch
      %403 = sbr.rel (%p400) target = $region12
    $region11: #{gpt_forward.2} parent=5 // pred_region
      %s404 = ssub.s32 %s20, 1
      // Predicated region
      $region13: #{gpt_forward.2} parent=11 // pred_check
        %p405 = pneg %p41
      $region14: #{gpt_forward.2} parent=11 // pred_check_branch
        %407 = sbr.rel (%p405) target = $region16
      $region15: #{gpt_forward.2} parent=11 // pred_region
        _
      $region16: #{gpt_forward.2} parent=11 // pred_fallthru
        _
      // Predicated region
      $region17: #{gpt_forward.2} parent=11 // pred_check
        %p408 = pneg %p348
      $region18: #{gpt_forward.2} parent=11 // pred_check_branch
        %410 = sbr.rel (%p408) target = $region20
      $region19: #{gpt_forward.2} parent=11 // pred_region
        _
      $region20: #{gpt_forward.2} parent=11 // pred_fallthru
        _
      // Predicated region
      $region21: #{gpt_forward.2} parent=11 // pred_check
        %p411 = pneg %p369
      $region22: #{gpt_forward.2} parent=11 // pred_check_branch
        %413 = sbr.rel (%p411) target = $region24
      $region23: #{gpt_forward.2} parent=11 // pred_region
        _
      $region24: #{gpt_forward.2} parent=11 // pred_fallthru
        _
    $region12: #{gpt_forward.2} parent=5 // pred_fallthru
      _
    %p414 = scmp.lt.s32.totalorder %s20, 2
    // Predicated region
    $region25: #{gpt_forward.2} parent=5 // pred_check
      %p415 = pneg %p414
    $region26: #{gpt_forward.2} parent=5 // pred_check_branch
      %417 = sbr.rel (%p415) target = $region28
    $region27: #{gpt_forward.2} parent=5 // pred_region
      // Predicated region
      $region29: #{gpt_forward.2} parent=27 // pred_check
        %p418 = pneg %p61
      $region30: #{gpt_forward.2} parent=27 // pred_check_branch
        %420 = sbr.rel (%p418) target = $region32
      $region31: #{gpt_forward.2} parent=27 // pred_region
        %p421 = scmp.lt.s32.totalorder %s20, 1
        %s422 = scalar_select %p421, %s20, 1
        %s423 = scalar_lea.vmem %s1, %s422
      $region32: #{gpt_forward.2} parent=27 // pred_fallthru
        _
      // Predicated region
      $region33: #{gpt_forward.2} parent=27 // pred_check
        %p424 = pneg %p87
      $region34: #{gpt_forward.2} parent=27 // pred_check_branch
        %426 = sbr.rel (%p424) target = $region36
      $region35: #{gpt_forward.2} parent=27 // pred_region
        %p427 = scmp.lt.s32.totalorder %s20, 1
        %s428 = scalar_select %p427, %s20, 1
        %s429 = scalar_lea.vmem %s2, %s428
      $region36: #{gpt_forward.2} parent=27 // pred_fallthru
        _
      // Predicated region
      $region37: #{gpt_forward.2} parent=27 // pred_check
        %p430 = pneg %p113
      $region38: #{gpt_forward.2} parent=27 // pred_check_branch
        %432 = sbr.rel (%p430) target = $region40
      $region39: #{gpt_forward.2} parent=27 // pred_region
        %p433 = scmp.lt.s32.totalorder %s20, 1
        %s434 = scalar_select %p433, %s20, 1
        %s435 = smul.addr %s434, 4
        %s436 = smul.addr %s435, 4
        %s437 = scalar_lea.vmem %s3, %s436
      $region40: #{gpt_forward.2} parent=27 // pred_fallthru
        _
      // Predicated region
      $region41: #{gpt_forward.2} parent=27 // pred_check
        %p438 = pneg %p139
      $region42: #{gpt_forward.2} parent=27 // pred_check_branch
        %440 = sbr.rel (%p438) target = $region44
      $region43: #{gpt_forward.2} parent=27 // pred_region
        %p441 = scmp.lt.s32.totalorder %s20, 1
        %s442 = scalar_select %p441, %s20, 1
        %s443 = smul.addr %s442, 4
        %s444 = smul.addr %s443, 4
        %s445 = scalar_lea.vmem %s4, %s444
      $region44: #{gpt_forward.2} parent=27 // pred_fallthru
        _
      // Predicated region
      $region45: #{gpt_forward.2} parent=27 // pred_check
        %p446 = pneg %p165
      $region46: #{gpt_forward.2} parent=27 // pred_check_branch
        %448 = sbr.rel (%p446) target = $region48
      $region47: #{gpt_forward.2} parent=27 // pred_region
        %p449 = scmp.lt.s32.totalorder %s20, 1
        %s450 = scalar_select %p449, %s20, 1
        %s451 = scalar_lea.vmem %s5, %s450
      $region48: #{gpt_forward.2} parent=27 // pred_fallthru
        _
      // Predicated region
      $region49: #{gpt_forward.2} parent=27 // pred_check
        %p452 = pneg %p191
      $region50: #{gpt_forward.2} parent=27 // pred_check_branch
        %454 = sbr.rel (%p452) target = $region52
      $region51: #{gpt_forward.2} parent=27 // pred_region
        %p455 = scmp.lt.s32.totalorder %s20, 1
        %s456 = scalar_select %p455, %s20, 1
        %s457 = scalar_lea.vmem %s6, %s456
      $region52: #{gpt_forward.2} parent=27 // pred_fallthru
        _
      // Predicated region
      $region53: #{gpt_forward.2} parent=27 // pred_check
        %p458 = pneg %p217
      $region54: #{gpt_forward.2} parent=27 // pred_check_branch
        %460 = sbr.rel (%p458) target = $region56
      $region55: #{gpt_forward.2} parent=27 // pred_region
        %p461 = scmp.lt.s32.totalorder %s20, 1
        %s462 = scalar_select %p461, %s20, 1
        %s463 = scalar_lea.vmem %s7, %s462
      $region56: #{gpt_forward.2} parent=27 // pred_fallthru
        _
      // Predicated region
      $region57: #{gpt_forward.2} parent=27 // pred_check
        %p464 = pneg %p243
      $region58: #{gpt_forward.2} parent=27 // pred_check_branch
        %466 = sbr.rel (%p464) target = $region60
      $region59: #{gpt_forward.2} parent=27 // pred_region
        %p467 = scmp.lt.s32.totalorder %s20, 1
        %s468 = scalar_select %p467, %s20, 1
        %s469 = smul.addr %s468, 4
        %s470 = smul.addr %s469, 4
        %s471 = scalar_lea.vmem %s8, %s470
      $region60: #{gpt_forward.2} parent=27 // pred_fallthru
        _
      // Predicated region
      $region61: #{gpt_forward.2} parent=27 // pred_check
        %p472 = pneg %p269
      $region62: #{gpt_forward.2} parent=27 // pred_check_branch
        %474 = sbr.rel (%p472) target = $region64
      $region63: #{gpt_forward.2} parent=27 // pred_region
        %p475 = scmp.lt.s32.totalorder %s20, 1
        %s476 = scalar_select %p475, %s20, 1
        %s477 = scalar_lea.vmem %s9, %s476
      $region64: #{gpt_forward.2} parent=27 // pred_fallthru
        _
      // Predicated region
      $region65: #{gpt_forward.2} parent=27 // pred_check
        %p478 = pneg %p295
      $region66: #{gpt_forward.2} parent=27 // pred_check_branch
        %480 = sbr.rel (%p478) target = $region68
      $region67: #{gpt_forward.2} parent=27 // pred_region
        %p481 = scmp.lt.s32.totalorder %s20, 1
        %s482 = scalar_select %p481, %s20, 1
        %s483 = smul.addr %s482, 16
        %s484 = smul.addr %s483, 4
        %s485 = scalar_lea.vmem %s10, %s484
      $region68: #{gpt_forward.2} parent=27 // pred_fallthru
        _
      // Predicated region
      $region69: #{gpt_forward.2} parent=27 // pred_check
        %p486 = pneg %p321
      $region70: #{gpt_forward.2} parent=27 // pred_check_branch
        %488 = sbr.rel (%p486) target = $region72
      $region71: #{gpt_forward.2} parent=27 // pred_region
        %p489 = scmp.lt.s32.totalorder %s20, 1
        %s490 = scalar_select %p489, %s20, 1
        %s491 = scalar_lea.vmem %s11, %s490
      $region72: #{gpt_forward.2} parent=27 // pred_fallthru
        _
    $region28: #{gpt_forward.2} parent=5 // pred_fallthru
      _
    %p492 = scmp.le.s32.totalorder 1, %s20
    %p493 = scmp.lt.s32.totalorder %s20, 3
    %p494 = pnand %p492, %p493
    %p495 = pneg %p494
    // Predicated region
    $region73: #{gpt_forward.2} parent=5 // pred_check
      _
    $region74: #{gpt_forward.2} parent=5 // pred_check_branch
      %497 = sbr.rel (%p494) target = $region76
    $region75: #{gpt_forward.2} parent=5 // pred_region
      %s498 = ssub.s32 %s20, 1
      %p499 = pneg %p41
      %p500 = pneg %p38
      %p501 = scmp.lt.s32.totalorder %s25, 1
      %s502 = scalar_select %p501, %s25, 1
      %s503 = scalar_lea.vmem %s1, %s502
      %p504 = pneg %p67
      %p505 = pneg %p64
      %p506 = scmp.lt.s32.totalorder %s25, 1
      %s507 = scalar_select %p506, %s25, 1
      %s508 = scalar_lea.vmem %s2, %s507
      %p509 = pneg %p93
      %p510 = pneg %p90
      %p511 = scmp.lt.s32.totalorder %s25, 1
      %s512 = scalar_select %p511, %s25, 1
      %s513 = smul.addr %s512, 4
      %s514 = smul.addr %s513, 4
      %s515 = scalar_lea.vmem %s3, %s514
      %p516 = pneg %p119
      %p517 = pneg %p116
      %p518 = scmp.lt.s32.totalorder %s25, 1
      %s519 = scalar_select %p518, %s25, 1
      %s520 = smul.addr %s519, 4
      %s521 = smul.addr %s520, 4
      %s522 = scalar_lea.vmem %s4, %s521
      %p523 = pneg %p145
      %p524 = pneg %p142
      %p525 = scmp.lt.s32.totalorder %s25, 1
      %s526 = scalar_select %p525, %s25, 1
      %s527 = scalar_lea.vmem %s5, %s526
      %p528 = pneg %p171
      %p529 = pneg %p168
      %p530 = scmp.lt.s32.totalorder %s25, 1
      %s531 = scalar_select %p530, %s25, 1
      %s532 = scalar_lea.vmem %s6, %s531
      %p533 = pneg %p197
      %p534 = pneg %p194
      %p535 = scmp.lt.s32.totalorder %s25, 1
      %s536 = scalar_select %p535, %s25, 1
      %s537 = scalar_lea.vmem %s7, %s536
      %p538 = pneg %p223
      %p539 = pneg %p220
      %p540 = scmp.lt.s32.totalorder %s25, 1
      %s541 = scalar_select %p540, %s25, 1
      %s542 = smul.addr %s541, 4
      %s543 = smul.addr %s542, 4
      %s544 = scalar_lea.vmem %s8, %s543
      %p545 = pneg %p249
      %p546 = pneg %p246
      %p547 = scmp.lt.s32.totalorder %s25, 1
      %s548 = scalar_select %p547, %s25, 1
      %s549 = scalar_lea.vmem %s9, %s548
      %p550 = pneg %p275
      %p551 = pneg %p272
      %p552 = scmp.lt.s32.totalorder %s25, 1
      %s553 = scalar_select %p552, %s25, 1
      %s554 = smul.addr %s553, 16
      %s555 = smul.addr %s554, 4
      %s556 = scalar_lea.vmem %s10, %s555
      %p557 = pneg %p301
      %p558 = pneg %p298
      %p559 = scmp.lt.s32.totalorder %s25, 1
      %s560 = scalar_select %p559, %s25, 1
      %s561 = scalar_lea.vmem %s11, %s560
      %p562 = pneg %p327
      %p563 = pneg %p324
      %p564 = pneg %p348
      %p565 = pneg %p345
      %p566 = pneg %p369
      %p567 = pneg %p366
      %p568 = pneg %p390
      %p569 = pneg %p387
      %p570 = scmp.lt.s32.totalorder %s25, 1
      %s571 = scalar_select %p570, %s25, 1
      %s572 = scalar_lea.vmem %s1, %s571
      %p573 = scmp.lt.s32.totalorder %s25, 1
      %s574 = scalar_select %p573, %s25, 1
      %s575 = scalar_lea.vmem %s2, %s574
      %p576 = scmp.lt.s32.totalorder %s25, 1
      %s577 = scalar_select %p576, %s25, 1
      %s578 = smul.addr %s577, 4
      %s579 = smul.addr %s578, 4
      %s580 = scalar_lea.vmem %s3, %s579
      %p581 = scmp.lt.s32.totalorder %s25, 1
      %s582 = scalar_select %p581, %s25, 1
      %s583 = smul.addr %s582, 4
      %s584 = smul.addr %s583, 4
      %s585 = scalar_lea.vmem %s4, %s584
      %p586 = scmp.lt.s32.totalorder %s25, 1
      %s587 = scalar_select %p586, %s25, 1
      %s588 = scalar_lea.vmem %s5, %s587
      %p589 = scmp.lt.s32.totalorder %s25, 1
      %s590 = scalar_select %p589, %s25, 1
      %s591 = scalar_lea.vmem %s6, %s590
      %p592 = scmp.lt.s32.totalorder %s25, 1
      %s593 = scalar_select %p592, %s25, 1
      %s594 = scalar_lea.vmem %s7, %s593
      %p595 = scmp.lt.s32.totalorder %s25, 1
      %s596 = scalar_select %p595, %s25, 1
      %s597 = smul.addr %s596, 4
      %s598 = smul.addr %s597, 4
      %s599 = scalar_lea.vmem %s8, %s598
      %p600 = scmp.lt.s32.totalorder %s25, 1
      %s601 = scalar_select %p600, %s25, 1
      %s602 = scalar_lea.vmem %s9, %s601
      %p603 = scmp.lt.s32.totalorder %s25, 1
      %s604 = scalar_select %p603, %s25, 1
      %s605 = smul.addr %s604, 16
      %s606 = smul.addr %s605, 4
      %s607 = scalar_lea.vmem %s10, %s606
      %p608 = scmp.lt.s32.totalorder %s25, 1
      %s609 = scalar_select %p608, %s25, 1
      %s610 = scalar_lea.vmem %s11, %s609
      %p612 = scmp.eq.s32.totalorder %s25, 0
      // Predicated region
      $region77: #{gpt_forward.2} parent=75 // pred_check
        %p613 = pneg %p612
      $region78: #{gpt_forward.2} parent=75 // pred_check_branch
        %615 = sbr.rel (%p613) target = $region80
      $region79: #{gpt_forward.2} parent=75 // pred_region
        %v616 = vld [vmem:[%s0] sm:$0xff]
        %v617 = vld [vmem:[%s0 + $0x8] sm:$0xff]
        %vm618 = vcmask 261120
        %619 = vst.msk [vmem:[%s14] sm:$0xff] %vm618, %v616
        %620 = vst.msk [vmem:[%s14 + $0x8] sm:$0xff] %vm618, %v617
      $region80: #{gpt_forward.2} parent=75 // pred_fallthru
        _
      %v621 = vld [vmem:[%s14] sm:$0xff]
      %v622 = vld [vmem:[%s14 + $0x8] sm:$0xff]
      %v623 = vlaneseq
      %v624 = vshrl.u32 %v623, 7
      %v625 = vlaneseq
      %v626 = vand.u32 %v625, 127
      %vm627 = vcmp.gt.s32.totalorder %v626, %v624
      %v628 = vsel %vm627, -1e+30, 0.0
      %v629 = vld [vmem:[%s572] sm:$0x1]
      %v630 = vld [vmem:[%s575] sm:$0x1]
      %vm631 = vcmask 261120
      %v632 = vsel %vm631, %v621, 0.0
      %633 = vadd.xlane.f32.xlu0 %v632
      %v634 = vpop.xlane.xlu0 %633
      %v635 = vsel %vm631, %v622, 0.0
      %636 = vadd.xlane.f32.xlu0 %v635
      %v637 = vpop.xlane.xlu0 %636
      %v638 = vrcp.pop 32.0
      %v639 = vmul.f32 32.0, %v638
      %v640 = vsub.f32 1.0, %v639
      %v641 = vmul.f32 %v638, %v640
      %v642 = vadd.f32 %v638, %v641
      %vm643 = vweird.f32 %v638
      %v644 = vsel %vm643, %v638, %v642
      %v645 = vmul.f32 %v634, %v644
      %v646 = vmul.f32 %v637, %v644
      %v647 = vsub.f32 %v621, %v645
      %v648 = vsub.f32 %v622, %v646
      %v649 = vmul.f32 %v647, %v647
      %v650 = vmul.f32 %v648, %v648
      %v651 = vsel %vm631, %v649, 0.0
      %652 = vadd.xlane.f32.xlu0 %v651
      %v653 = vpop.xlane.xlu0 %652
      %v654 = vsel %vm631, %v650, 0.0
      %655 = vadd.xlane.f32.xlu0 %v654
      %v656 = vpop.xlane.xlu0 %655
      %v657 = vmul.f32 %v653, %v644
      %v658 = vmul.f32 %v656, %v644
      %v659 = vadd.f32 %v657, 1e-05
      %v660 = vadd.f32 %v658, 1e-05
      %v661 = vrsqrt.pop %v659
      %v662 = vmul.f32 %v661, %v659
      %v663 = vmul.f32 %v662, %v661
      %v664 = vmul.f32 0.5, %v663
      %v665 = vsub.f32 1.5, %v664
      %v666 = vmul.f32 %v661, %v665
      %vm667 = vweird.f32 %v659
      %vm668 = vweird.f32 %v661
      %vm669 = vmor %vm667, %vm668
      %v670 = vsel %vm669, %v661, %v666
      %v671 = vrsqrt.pop %v660
      %v672 = vmul.f32 %v671, %v660
      %v673 = vmul.f32 %v672, %v671
      %v674 = vmul.f32 0.5, %v673
      %v675 = vsub.f32 1.5, %v674
      %v676 = vmul.f32 %v671, %v675
      %vm677 = vweird.f32 %v660
      %vm678 = vweird.f32 %v671
      %vm679 = vmor %vm677, %vm678
      %v680 = vsel %vm679, %v671, %v676
      %v681 = vmul.f32 %v647, %v670
      %v682 = vmul.f32 %v648, %v680
      %v684 = vperm.slane %v629, 0
      %v686 = vmul.f32 %v684, %v681
      %v687 = vmul.f32 %v684, %v682
      %v689 = vperm.slane %v630, 0
      %v691 = vadd.f32 %v686, %v689
      %v692 = vadd.f32 %v687, %v689
      %v693 = vpack.c.bf16 %v692, %v691
      %v694 = vld [vmem:[%s580] sm:$0xf]
      %v695 = vld [vmem:[%s580 + $0x4] sm:$0xf]
      %v696 = vld [vmem:[%s580 + $0x8] sm:$0xf]
      %v697 = vld [vmem:[%s580 + $0xc] sm:$0xf]
      %v702 = vunpack.c.l.b16 %v694
      %v703 = vunpack.c.l.b16 %v695
      %v704 = vunpack.c.l.b16 %v696
      %v705 = vunpack.c.l.b16 %v697
      %v706 = vpack.c.b16 %v703, %v702
      %v707 = vpack.c.b16 %v705, %v704
      %v711 = vsel %vm631, %v693, 0
      %713 = vmatpush.bf16.msra.mxu0 0
      %714 = vmatpush.bf16.msra.mxu0 0
      %715 = vmatpush.bf16.msra.mxu0 0
      %716 = vmatpush.bf16.msra.mxu0 0
      %717 = vmatpush.bf16.msra.mxu0 0
      %718 = vmatpush.bf16.msra.mxu0 0
      %719 = vmatpush.bf16.msra.mxu0 %v707
      %720 = vmatpush.bf16.msra.mxu0 %v706
      %721 = vmatmul.bf16.gmra.mxu0 %v711
      %v722 = vpop.f32.mrf.mxu0
      %v723 = vadd.f32 0.0, %v722
      %v724 = vpop.f32.mrf.mxu0
      %v725 = vadd.f32 0.0, %v724
      %726 = vdwg.mxu0
      %729 = vrot.lane.b32.xlu0 %v723, 120
      %v730 = vpop.permute.xlu0 %729
      %731 = vrot.lane.b32.xlu0 %v725, 120
      %v732 = vpop.permute.xlu0 %731
      %735 = vrot.lane.b32.xlu0 %v723, 112
      %v736 = vpop.permute.xlu0 %735
      %737 = vrot.lane.b32.xlu0 %v725, 112
      %v738 = vpop.permute.xlu0 %737
      %741 = vrot.lane.b32.xlu0 %v723, 104
      %v742 = vpop.permute.xlu0 %741
      %743 = vrot.lane.b32.xlu0 %v725, 104
      %v744 = vpop.permute.xlu0 %743
      %v747 = vrot.slane %v736, 4
      %vm748 = vcmask 1047556
      %v749 = vsel %vm748, %v747, %v723
      %v750 = vrot.slane %v723, 4
      %v751 = vsel %vm748, %v736, %v750
      %v753 = vunpack.c.l.s4 1983009808
      %v754 = vunpack.c.0.s8 %v753
      %v755 = vperm.slane %v749, %v754
      %v757 = vunpack.c.l.s4 1983009808
      %v758 = vunpack.c.0.s8 %v757
      %v759 = vperm.slane %v751, %v758
      %v760 = vrot.slane %v742, 4
      %v761 = vsel %vm748, %v760, %v730
      %v762 = vrot.slane %v730, 4
      %v763 = vsel %vm748, %v742, %v762
      %v765 = vunpack.c.l.s4 1983009808
      %v766 = vunpack.c.0.s8 %v765
      %v767 = vperm.slane %v761, %v766
      %v769 = vunpack.c.l.s4 1983009808
      %v770 = vunpack.c.0.s8 %v769
      %v771 = vperm.slane %v763, %v770
      %v772 = vrot.slane %v767, 4
      %v773 = vsel %vm748, %v772, %v755
      %v774 = vrot.slane %v755, 4
      %v775 = vsel %vm748, %v767, %v774
      %v777 = vunpack.c.l.s4 1934713408
      %v778 = vunpack.c.0.s8 %v777
      %v779 = vperm.slane %v773, %v778
      %v781 = vunpack.c.l.s4 1934713408
      %v782 = vunpack.c.0.s8 %v781
      %v783 = vperm.slane %v775, %v782
      %v784 = vrot.slane %v771, 4
      %v785 = vsel %vm748, %v784, %v759
      %v786 = vrot.slane %v759, 4
      %v787 = vsel %vm748, %v771, %v786
      %v789 = vunpack.c.l.s4 1934713408
      %v790 = vunpack.c.0.s8 %v789
      %v791 = vperm.slane %v785, %v790
      %v793 = vunpack.c.l.s4 1934713408
      %v794 = vunpack.c.0.s8 %v793
      %v795 = vperm.slane %v787, %v794
      %v796 = vrot.slane %v779, 4
      %v797 = vsel %vm748, 0.0, %v796
      %v798 = vrot.slane %v783, 4
      %v799 = vsel %vm748, 0.0, %v798
      %v800 = vrot.slane %v791, 4
      %v801 = vsel %vm748, 0.0, %v800
      %v802 = vrot.slane %v795, 4
      %v803 = vsel %vm748, 0.0, %v802
      %v804 = vrot.slane %v738, 4
      %v805 = vsel %vm748, %v804, %v725
      %v806 = vrot.slane %v725, 4
      %v807 = vsel %vm748, %v738, %v806
      %v809 = vunpack.c.l.s4 1983009808
      %v810 = vunpack.c.0.s8 %v809
      %v811 = vperm.slane %v805, %v810
      %v813 = vunpack.c.l.s4 1983009808
      %v814 = vunpack.c.0.s8 %v813
      %v815 = vperm.slane %v807, %v814
      %v816 = vrot.slane %v744, 4
      %v817 = vsel %vm748, %v816, %v732
      %v818 = vrot.slane %v732, 4
      %v819 = vsel %vm748, %v744, %v818
      %v821 = vunpack.c.l.s4 1983009808
      %v822 = vunpack.c.0.s8 %v821
      %v823 = vperm.slane %v817, %v822
      %v825 = vunpack.c.l.s4 1983009808
      %v826 = vunpack.c.0.s8 %v825
      %v827 = vperm.slane %v819, %v826
      %v828 = vrot.slane %v823, 4
      %v829 = vsel %vm748, %v828, %v811
      %v830 = vrot.slane %v811, 4
      %v831 = vsel %vm748, %v823, %v830
      %v833 = vunpack.c.l.s4 1934713408
      %v834 = vunpack.c.0.s8 %v833
      %v835 = vperm.slane %v829, %v834
      %v837 = vunpack.c.l.s4 1934713408
      %v838 = vunpack.c.0.s8 %v837
      %v839 = vperm.slane %v831, %v838
      %v840 = vrot.slane %v827, 4
      %v841 = vsel %vm748, %v840, %v815
      %v842 = vrot.slane %v815, 4
      %v843 = vsel %vm748, %v827, %v842
      %v845 = vunpack.c.l.s4 1934713408
      %v846 = vunpack.c.0.s8 %v845
      %v847 = vperm.slane %v841, %v846
      %v849 = vunpack.c.l.s4 1934713408
      %v850 = vunpack.c.0.s8 %v849
      %v851 = vperm.slane %v843, %v850
      %v852 = vrot.slane %v835, 4
      %v853 = vsel %vm748, 0.0, %v852
      %v854 = vrot.slane %v839, 4
      %v855 = vsel %vm748, 0.0, %v854
      %v856 = vrot.slane %v847, 4
      %v857 = vsel %vm748, 0.0, %v856
      %v858 = vrot.slane %v851, 4
      %v859 = vsel %vm748, 0.0, %v858
      %v860 = vsel %vm748, %v798, %v779
      %v862 = vunpack.c.l.s4 1983009808
      %v863 = vunpack.c.0.s8 %v862
      %v864 = vperm.slane %v860, %v863
      %v865 = vrot.slane %v799, 4
      %v866 = vsel %vm748, %v865, %v797
      %v868 = vunpack.c.l.s4 1983009808
      %v869 = vunpack.c.0.s8 %v868
      %v870 = vperm.slane %v866, %v869
      %v871 = vsel %vm748, %v802, %v791
      %v873 = vunpack.c.l.s4 1983009808
      %v874 = vunpack.c.0.s8 %v873
      %v875 = vperm.slane %v871, %v874
      %v876 = vrot.slane %v803, 4
      %v877 = vsel %vm748, %v876, %v801
      %v879 = vunpack.c.l.s4 1983009808
      %v880 = vunpack.c.0.s8 %v879
      %v881 = vperm.slane %v877, %v880
      %v882 = vrot.slane %v870, 4
      %v883 = vsel %vm748, %v882, %v864
      %v884 = vrot.slane %v864, 4
      %v885 = vsel %vm748, %v870, %v884
      %v887 = vunpack.c.l.s4 1934713408
      %v888 = vunpack.c.0.s8 %v887
      %v889 = vperm.slane %v883, %v888
      %v891 = vunpack.c.l.s4 1934713408
      %v892 = vunpack.c.0.s8 %v891
      %v893 = vperm.slane %v885, %v892
      %v894 = vrot.slane %v881, 4
      %v895 = vsel %vm748, %v894, %v875
      %v896 = vrot.slane %v875, 4
      %v897 = vsel %vm748, %v881, %v896
      %v899 = vunpack.c.l.s4 1934713408
      %v900 = vunpack.c.0.s8 %v899
      %v901 = vperm.slane %v895, %v900
      %v903 = vunpack.c.l.s4 1934713408
      %v904 = vunpack.c.0.s8 %v903
      %v905 = vperm.slane %v897, %v904
      %v906 = vrot.slane %v901, 4
      %v907 = vsel %vm748, %v906, %v889
      %v908 = vrot.slane %v889, 4
      %v909 = vsel %vm748, %v901, %v908
      %v910 = vrot.slane %v905, 4
      %v911 = vsel %vm748, %v910, %v893
      %v912 = vrot.slane %v893, 4
      %v913 = vsel %vm748, %v905, %v912
      %v914 = vsel %vm748, %v854, %v835
      %v916 = vunpack.c.l.s4 1983009808
      %v917 = vunpack.c.0.s8 %v916
      %v918 = vperm.slane %v914, %v917
      %v919 = vrot.slane %v855, 4
      %v920 = vsel %vm748, %v919, %v853
      %v922 = vunpack.c.l.s4 1983009808
      %v923 = vunpack.c.0.s8 %v922
      %v924 = vperm.slane %v920, %v923
      %v925 = vsel %vm748, %v858, %v847
      %v927 = vunpack.c.l.s4 1983009808
      %v928 = vunpack.c.0.s8 %v927
      %v929 = vperm.slane %v925, %v928
      %v930 = vrot.slane %v859, 4
      %v931 = vsel %vm748, %v930, %v857
      %v933 = vunpack.c.l.s4 1983009808
      %v934 = vunpack.c.0.s8 %v933
      %v935 = vperm.slane %v931, %v934
      %v936 = vrot.slane %v924, 4
      %v937 = vsel %vm748, %v936, %v918
      %v938 = vrot.slane %v918, 4
      %v939 = vsel %vm748, %v924, %v938
      %v941 = vunpack.c.l.s4 1934713408
      %v942 = vunpack.c.0.s8 %v941
      %v943 = vperm.slane %v937, %v942
      %v945 = vunpack.c.l.s4 1934713408
      %v946 = vunpack.c.0.s8 %v945
      %v947 = vperm.slane %v939, %v946
      %v948 = vrot.slane %v935, 4
      %v949 = vsel %vm748, %v948, %v929
      %v950 = vrot.slane %v929, 4
      %v951 = vsel %vm748, %v935, %v950
      %v953 = vunpack.c.l.s4 1934713408
      %v954 = vunpack.c.0.s8 %v953
      %v955 = vperm.slane %v949, %v954
      %v957 = vunpack.c.l.s4 1934713408
      %v958 = vunpack.c.0.s8 %v957
      %v959 = vperm.slane %v951, %v958
      %v960 = vrot.slane %v955, 4
      %v961 = vsel %vm748, %v960, %v943
      %v962 = vrot.slane %v943, 4
      %v963 = vsel %vm748, %v955, %v962
      %v964 = vrot.slane %v959, 4
      %v965 = vsel %vm748, %v964, %v947
      %v966 = vrot.slane %v947, 4
      %v967 = vsel %vm748, %v959, %v966
      %v968 = vpack.c.bf16 %v907, %v907
      %v969 = vpack.c.bf16 %v961, %v961
      %v970 = vpack.c.bf16 %v909, %v909
      %v971 = vpack.c.bf16 %v963, %v963
      %v972 = vpack.c.bf16 %v911, %v911
      %v973 = vpack.c.bf16 %v965, %v965
      %v974 = vpack.c.bf16 %v913, %v913
      %v975 = vpack.c.bf16 %v967, %v967
      %976 = vrot.lane.b32.xlu0 %v723, 96
      %v977 = vpop.permute.xlu0 %976
      %978 = vrot.lane.b32.xlu0 %v725, 96
      %v979 = vpop.permute.xlu0 %978
      %980 = vrot.lane.b32.xlu0 %v730, 96
      %v981 = vpop.permute.xlu0 %980
      %982 = vrot.lane.b32.xlu0 %v732, 96
      %v983 = vpop.permute.xlu0 %982
      %984 = vrot.lane.b32.xlu0 %v736, 96
      %v985 = vpop.permute.xlu0 %984
      %986 = vrot.lane.b32.xlu0 %v738, 96
      %v987 = vpop.permute.xlu0 %986
      %988 = vrot.lane.b32.xlu0 %v742, 96
      %v989 = vpop.permute.xlu0 %988
      %990 = vrot.lane.b32.xlu0 %v744, 96
      %v991 = vpop.permute.xlu0 %990
      %v1000 = vrot.slane %v985, 4
      %v1001 = vsel %vm748, %v1000, %v977
      %v1002 = vrot.slane %v977, 4
      %v1003 = vsel %vm748, %v985, %v1002
      %v1005 = vunpack.c.l.s4 1983009808
      %v1006 = vunpack.c.0.s8 %v1005
      %v1007 = vperm.slane %v1001, %v1006
      %v1009 = vunpack.c.l.s4 1983009808
      %v1010 = vunpack.c.0.s8 %v1009
      %v1011 = vperm.slane %v1003, %v1010
      %v1012 = vrot.slane %v989, 4
      %v1013 = vsel %vm748, %v1012, %v981
      %v1014 = vrot.slane %v981, 4
      %v1015 = vsel %vm748, %v989, %v1014
      %v1017 = vunpack.c.l.s4 1983009808
      %v1018 = vunpack.c.0.s8 %v1017
      %v1019 = vperm.slane %v1013, %v1018
      %v1021 = vunpack.c.l.s4 1983009808
      %v1022 = vunpack.c.0.s8 %v1021
      %v1023 = vperm.slane %v1015, %v1022
      %v1024 = vrot.slane %v1019, 4
      %v1025 = vsel %vm748, %v1024, %v1007
      %v1026 = vrot.slane %v1007, 4
      %v1027 = vsel %vm748, %v1019, %v1026
      %v1029 = vunpack.c.l.s4 1934713408
      %v1030 = vunpack.c.0.s8 %v1029
      %v1031 = vperm.slane %v1025, %v1030
      %v1033 = vunpack.c.l.s4 1934713408
      %v1034 = vunpack.c.0.s8 %v1033
      %v1035 = vperm.slane %v1027, %v1034
      %v1036 = vrot.slane %v1023, 4
      %v1037 = vsel %vm748, %v1036, %v1011
      %v1038 = vrot.slane %v1011, 4
      %v1039 = vsel %vm748, %v1023, %v1038
      %v1041 = vunpack.c.l.s4 1934713408
      %v1042 = vunpack.c.0.s8 %v1041
      %v1043 = vperm.slane %v1037, %v1042
      %v1045 = vunpack.c.l.s4 1934713408
      %v1046 = vunpack.c.0.s8 %v1045
      %v1047 = vperm.slane %v1039, %v1046
      %v1048 = vrot.slane %v1031, 4
      %v1049 = vsel %vm748, 0.0, %v1048
      %v1050 = vrot.slane %v1035, 4
      %v1051 = vsel %vm748, 0.0, %v1050
      %v1052 = vrot.slane %v1043, 4
      %v1053 = vsel %vm748, 0.0, %v1052
      %v1054 = vrot.slane %v1047, 4
      %v1055 = vsel %vm748, 0.0, %v1054
      %v1056 = vrot.slane %v987, 4
      %v1057 = vsel %vm748, %v1056, %v979
      %v1058 = vrot.slane %v979, 4
      %v1059 = vsel %vm748, %v987, %v1058
      %v1061 = vunpack.c.l.s4 1983009808
      %v1062 = vunpack.c.0.s8 %v1061
      %v1063 = vperm.slane %v1057, %v1062
      %v1065 = vunpack.c.l.s4 1983009808
      %v1066 = vunpack.c.0.s8 %v1065
      %v1067 = vperm.slane %v1059, %v1066
      %v1068 = vrot.slane %v991, 4
      %v1069 = vsel %vm748, %v1068, %v983
      %v1070 = vrot.slane %v983, 4
      %v1071 = vsel %vm748, %v991, %v1070
      %v1073 = vunpack.c.l.s4 1983009808
      %v1074 = vunpack.c.0.s8 %v1073
      %v1075 = vperm.slane %v1069, %v1074
      %v1077 = vunpack.c.l.s4 1983009808
      %v1078 = vunpack.c.0.s8 %v1077
      %v1079 = vperm.slane %v1071, %v1078
      %v1080 = vrot.slane %v1075, 4
      %v1081 = vsel %vm748, %v1080, %v1063
      %v1082 = vrot.slane %v1063, 4
      %v1083 = vsel %vm748, %v1075, %v1082
      %v1085 = vunpack.c.l.s4 1934713408
      %v1086 = vunpack.c.0.s8 %v1085
      %v1087 = vperm.slane %v1081, %v1086
      %v1089 = vunpack.c.l.s4 1934713408
      %v1090 = vunpack.c.0.s8 %v1089
      %v1091 = vperm.slane %v1083, %v1090
      %v1092 = vrot.slane %v1079, 4
      %v1093 = vsel %vm748, %v1092, %v1067
      %v1094 = vrot.slane %v1067, 4
      %v1095 = vsel %vm748, %v1079, %v1094
      %v1097 = vunpack.c.l.s4 1934713408
      %v1098 = vunpack.c.0.s8 %v1097
      %v1099 = vperm.slane %v1093, %v1098
      %v1101 = vunpack.c.l.s4 1934713408
      %v1102 = vunpack.c.0.s8 %v1101
      %v1103 = vperm.slane %v1095, %v1102
      %v1104 = vrot.slane %v1087, 4
      %v1105 = vsel %vm748, 0.0, %v1104
      %v1106 = vrot.slane %v1091, 4
      %v1107 = vsel %vm748, 0.0, %v1106
      %v1108 = vrot.slane %v1099, 4
      %v1109 = vsel %vm748, 0.0, %v1108
      %v1110 = vrot.slane %v1103, 4
      %v1111 = vsel %vm748, 0.0, %v1110
      %v1112 = vsel %vm748, %v1050, %v1031
      %v1114 = vunpack.c.l.s4 1983009808
      %v1115 = vunpack.c.0.s8 %v1114
      %v1116 = vperm.slane %v1112, %v1115
      %v1117 = vrot.slane %v1051, 4
      %v1118 = vsel %vm748, %v1117, %v1049
      %v1120 = vunpack.c.l.s4 1983009808
      %v1121 = vunpack.c.0.s8 %v1120
      %v1122 = vperm.slane %v1118, %v1121
      %v1123 = vsel %vm748, %v1054, %v1043
      %v1125 = vunpack.c.l.s4 1983009808
      %v1126 = vunpack.c.0.s8 %v1125
      %v1127 = vperm.slane %v1123, %v1126
      %v1128 = vrot.slane %v1055, 4
      %v1129 = vsel %vm748, %v1128, %v1053
      %v1131 = vunpack.c.l.s4 1983009808
      %v1132 = vunpack.c.0.s8 %v1131
      %v1133 = vperm.slane %v1129, %v1132
      %v1134 = vrot.slane %v1122, 4
      %v1135 = vsel %vm748, %v1134, %v1116
      %v1136 = vrot.slane %v1116, 4
      %v1137 = vsel %vm748, %v1122, %v1136
      %v1139 = vunpack.c.l.s4 1934713408
      %v1140 = vunpack.c.0.s8 %v1139
      %v1141 = vperm.slane %v1135, %v1140
      %v1143 = vunpack.c.l.s4 1934713408
      %v1144 = vunpack.c.0.s8 %v1143
      %v1145 = vperm.slane %v1137, %v1144
      %v1146 = vrot.slane %v1133, 4
      %v1147 = vsel %vm748, %v1146, %v1127
      %v1148 = vrot.slane %v1127, 4
      %v1149 = vsel %vm748, %v1133, %v1148
      %v1151 = vunpack.c.l.s4 1934713408
      %v1152 = vunpack.c.0.s8 %v1151
      %v1153 = vperm.slane %v1147, %v1152
      %v1155 = vunpack.c.l.s4 1934713408
      %v1156 = vunpack.c.0.s8 %v1155
      %v1157 = vperm.slane %v1149, %v1156
      %v1158 = vrot.slane %v1153, 4
      %v1159 = vsel %vm748, %v1158, %v1141
      %v1160 = vrot.slane %v1141, 4
      %v1161 = vsel %vm748, %v1153, %v1160
      %v1162 = vrot.slane %v1157, 4
      %v1163 = vsel %vm748, %v1162, %v1145
      %v1164 = vrot.slane %v1145, 4
      %v1165 = vsel %vm748, %v1157, %v1164
      %v1166 = vsel %vm748, %v1106, %v1087
      %v1168 = vunpack.c.l.s4 1983009808
      %v1169 = vunpack.c.0.s8 %v1168
      %v1170 = vperm.slane %v1166, %v1169
      %v1171 = vrot.slane %v1107, 4
      %v1172 = vsel %vm748, %v1171, %v1105
      %v1174 = vunpack.c.l.s4 1983009808
      %v1175 = vunpack.c.0.s8 %v1174
      %v1176 = vperm.slane %v1172, %v1175
      %v1177 = vsel %vm748, %v1110, %v1099
      %v1179 = vunpack.c.l.s4 1983009808
      %v1180 = vunpack.c.0.s8 %v1179
      %v1181 = vperm.slane %v1177, %v1180
      %v1182 = vrot.slane %v1111, 4
      %v1183 = vsel %vm748, %v1182, %v1109
      %v1185 = vunpack.c.l.s4 1983009808
      %v1186 = vunpack.c.0.s8 %v1185
      %v1187 = vperm.slane %v1183, %v1186
      %v1188 = vrot.slane %v1176, 4
      %v1189 = vsel %vm748, %v1188, %v1170
      %v1190 = vrot.slane %v1170, 4
      %v1191 = vsel %vm748, %v1176, %v1190
      %v1193 = vunpack.c.l.s4 1934713408
      %v1194 = vunpack.c.0.s8 %v1193
      %v1195 = vperm.slane %v1189, %v1194
      %v1197 = vunpack.c.l.s4 1934713408
      %v1198 = vunpack.c.0.s8 %v1197
      %v1199 = vperm.slane %v1191, %v1198
      %v1200 = vrot.slane %v1187, 4
      %v1201 = vsel %vm748, %v1200, %v1181
      %v1202 = vrot.slane %v1181, 4
      %v1203 = vsel %vm748, %v1187, %v1202
      %v1205 = vunpack.c.l.s4 1934713408
      %v1206 = vunpack.c.0.s8 %v1205
      %v1207 = vperm.slane %v1201, %v1206
      %v1209 = vunpack.c.l.s4 1934713408
      %v1210 = vunpack.c.0.s8 %v1209
      %v1211 = vperm.slane %v1203, %v1210
      %v1212 = vrot.slane %v1207, 4
      %v1213 = vsel %vm748, %v1212, %v1195
      %v1214 = vrot.slane %v1195, 4
      %v1215 = vsel %vm748, %v1207, %v1214
      %v1216 = vrot.slane %v1211, 4
      %v1217 = vsel %vm748, %v1216, %v1199
      %v1218 = vrot.slane %v1199, 4
      %v1219 = vsel %vm748, %v1211, %v1218
      %v1220 = vpack.c.bf16 %v1159, %v1159
      %v1221 = vpack.c.bf16 %v1213, %v1213
      %v1222 = vpack.c.bf16 %v1161, %v1161
      %v1223 = vpack.c.bf16 %v1215, %v1215
      %v1224 = vpack.c.bf16 %v1163, %v1163
      %v1225 = vpack.c.bf16 %v1217, %v1217
      %v1226 = vpack.c.bf16 %v1165, %v1165
      %v1227 = vpack.c.bf16 %v1219, %v1219
      %1228 = vrot.lane.b32.xlu0 %v723, 64
      %v1229 = vpop.permute.xlu0 %1228
      %1230 = vrot.lane.b32.xlu0 %v725, 64
      %v1231 = vpop.permute.xlu0 %1230
      %1232 = vrot.lane.b32.xlu0 %v730, 64
      %v1233 = vpop.permute.xlu0 %1232
      %1234 = vrot.lane.b32.xlu0 %v732, 64
      %v1235 = vpop.permute.xlu0 %1234
      %1236 = vrot.lane.b32.xlu0 %v736, 64
      %v1237 = vpop.permute.xlu0 %1236
      %1238 = vrot.lane.b32.xlu0 %v738, 64
      %v1239 = vpop.permute.xlu0 %1238
      %1240 = vrot.lane.b32.xlu0 %v742, 64
      %v1241 = vpop.permute.xlu0 %1240
      %1242 = vrot.lane.b32.xlu0 %v744, 64
      %v1243 = vpop.permute.xlu0 %1242
      %v1252 = vrot.slane %v1237, 4
      %v1253 = vsel %vm748, %v1252, %v1229
      %v1254 = vrot.slane %v1229, 4
      %v1255 = vsel %vm748, %v1237, %v1254
      %v1257 = vunpack.c.l.s4 1983009808
      %v1258 = vunpack.c.0.s8 %v1257
      %v1259 = vperm.slane %v1253, %v1258
      %v1261 = vunpack.c.l.s4 1983009808
      %v1262 = vunpack.c.0.s8 %v1261
      %v1263 = vperm.slane %v1255, %v1262
      %v1264 = vrot.slane %v1241, 4
      %v1265 = vsel %vm748, %v1264, %v1233
      %v1266 = vrot.slane %v1233, 4
      %v1267 = vsel %vm748, %v1241, %v1266
      %v1269 = vunpack.c.l.s4 1983009808
      %v1270 = vunpack.c.0.s8 %v1269
      %v1271 = vperm.slane %v1265, %v1270
      %v1273 = vunpack.c.l.s4 1983009808
      %v1274 = vunpack.c.0.s8 %v1273
      %v1275 = vperm.slane %v1267, %v1274
      %v1276 = vrot.slane %v1271, 4
      %v1277 = vsel %vm748, %v1276, %v1259
      %v1278 = vrot.slane %v1259, 4
      %v1279 = vsel %vm748, %v1271, %v1278
      %v1281 = vunpack.c.l.s4 1934713408
      %v1282 = vunpack.c.0.s8 %v1281
      %v1283 = vperm.slane %v1277, %v1282
      %v1285 = vunpack.c.l.s4 1934713408
      %v1286 = vunpack.c.0.s8 %v1285
      %v1287 = vperm.slane %v1279, %v1286
      %v1288 = vrot.slane %v1275, 4
      %v1289 = vsel %vm748, %v1288, %v1263
      %v1290 = vrot.slane %v1263, 4
      %v1291 = vsel %vm748, %v1275, %v1290
      %v1293 = vunpack.c.l.s4 1934713408
      %v1294 = vunpack.c.0.s8 %v1293
      %v1295 = vperm.slane %v1289, %v1294
      %v1297 = vunpack.c.l.s4 1934713408
      %v1298 = vunpack.c.0.s8 %v1297
      %v1299 = vperm.slane %v1291, %v1298
      %v1300 = vrot.slane %v1283, 4
      %v1301 = vsel %vm748, 0.0, %v1300
      %v1302 = vrot.slane %v1287, 4
      %v1303 = vsel %vm748, 0.0, %v1302
      %v1304 = vrot.slane %v1295, 4
      %v1305 = vsel %vm748, 0.0, %v1304
      %v1306 = vrot.slane %v1299, 4
      %v1307 = vsel %vm748, 0.0, %v1306
      %v1308 = vrot.slane %v1239, 4
      %v1309 = vsel %vm748, %v1308, %v1231
      %v1310 = vrot.slane %v1231, 4
      %v1311 = vsel %vm748, %v1239, %v1310
      %v1313 = vunpack.c.l.s4 1983009808
      %v1314 = vunpack.c.0.s8 %v1313
      %v1315 = vperm.slane %v1309, %v1314
      %v1317 = vunpack.c.l.s4 1983009808
      %v1318 = vunpack.c.0.s8 %v1317
      %v1319 = vperm.slane %v1311, %v1318
      %v1320 = vrot.slane %v1243, 4
      %v1321 = vsel %vm748, %v1320, %v1235
      %v1322 = vrot.slane %v1235, 4
      %v1323 = vsel %vm748, %v1243, %v1322
      %v1325 = vunpack.c.l.s4 1983009808
      %v1326 = vunpack.c.0.s8 %v1325
      %v1327 = vperm.slane %v1321, %v1326
      %v1329 = vunpack.c.l.s4 1983009808
      %v1330 = vunpack.c.0.s8 %v1329
      %v1331 = vperm.slane %v1323, %v1330
      %v1332 = vrot.slane %v1327, 4
      %v1333 = vsel %vm748, %v1332, %v1315
      %v1334 = vrot.slane %v1315, 4
      %v1335 = vsel %vm748, %v1327, %v1334
      %v1337 = vunpack.c.l.s4 1934713408
      %v1338 = vunpack.c.0.s8 %v1337
      %v1339 = vperm.slane %v1333, %v1338
      %v1341 = vunpack.c.l.s4 1934713408
      %v1342 = vunpack.c.0.s8 %v1341
      %v1343 = vperm.slane %v1335, %v1342
      %v1344 = vrot.slane %v1331, 4
      %v1345 = vsel %vm748, %v1344, %v1319
      %v1346 = vrot.slane %v1319, 4
      %v1347 = vsel %vm748, %v1331, %v1346
      %v1349 = vunpack.c.l.s4 1934713408
      %v1350 = vunpack.c.0.s8 %v1349
      %v1351 = vperm.slane %v1345, %v1350
      %v1353 = vunpack.c.l.s4 1934713408
      %v1354 = vunpack.c.0.s8 %v1353
      %v1355 = vperm.slane %v1347, %v1354
      %v1356 = vrot.slane %v1339, 4
      %v1357 = vsel %vm748, 0.0, %v1356
      %v1358 = vrot.slane %v1343, 4
      %v1359 = vsel %vm748, 0.0, %v1358
      %v1360 = vrot.slane %v1351, 4
      %v1361 = vsel %vm748, 0.0, %v1360
      %v1362 = vrot.slane %v1355, 4
      %v1363 = vsel %vm748, 0.0, %v1362
      %v1364 = vsel %vm748, %v1302, %v1283
      %v1366 = vunpack.c.l.s4 1983009808
      %v1367 = vunpack.c.0.s8 %v1366
      %v1368 = vperm.slane %v1364, %v1367
      %v1369 = vrot.slane %v1303, 4
      %v1370 = vsel %vm748, %v1369, %v1301
      %v1372 = vunpack.c.l.s4 1983009808
      %v1373 = vunpack.c.0.s8 %v1372
      %v1374 = vperm.slane %v1370, %v1373
      %v1375 = vsel %vm748, %v1306, %v1295
      %v1377 = vunpack.c.l.s4 1983009808
      %v1378 = vunpack.c.0.s8 %v1377
      %v1379 = vperm.slane %v1375, %v1378
      %v1380 = vrot.slane %v1307, 4
      %v1381 = vsel %vm748, %v1380, %v1305
      %v1383 = vunpack.c.l.s4 1983009808
      %v1384 = vunpack.c.0.s8 %v1383
      %v1385 = vperm.slane %v1381, %v1384
      %v1386 = vrot.slane %v1374, 4
      %v1387 = vsel %vm748, %v1386, %v1368
      %v1388 = vrot.slane %v1368, 4
      %v1389 = vsel %vm748, %v1374, %v1388
      %v1391 = vunpack.c.l.s4 1934713408
      %v1392 = vunpack.c.0.s8 %v1391
      %v1393 = vperm.slane %v1387, %v1392
      %v1395 = vunpack.c.l.s4 1934713408
      %v1396 = vunpack.c.0.s8 %v1395
      %v1397 = vperm.slane %v1389, %v1396
      %v1398 = vrot.slane %v1385, 4
      %v1399 = vsel %vm748, %v1398, %v1379
      %v1400 = vrot.slane %v1379, 4
      %v1401 = vsel %vm748, %v1385, %v1400
      %v1403 = vunpack.c.l.s4 1934713408
      %v1404 = vunpack.c.0.s8 %v1403
      %v1405 = vperm.slane %v1399, %v1404
      %v1407 = vunpack.c.l.s4 1934713408
      %v1408 = vunpack.c.0.s8 %v1407
      %v1409 = vperm.slane %v1401, %v1408
      %v1410 = vrot.slane %v1405, 4
      %v1411 = vsel %vm748, %v1410, %v1393
      %v1412 = vrot.slane %v1393, 4
      %v1413 = vsel %vm748, %v1405, %v1412
      %v1414 = vrot.slane %v1409, 4
      %v1415 = vsel %vm748, %v1414, %v1397
      %v1416 = vrot.slane %v1397, 4
      %v1417 = vsel %vm748, %v1409, %v1416
      %v1418 = vsel %vm748, %v1358, %v1339
      %v1420 = vunpack.c.l.s4 1983009808
      %v1421 = vunpack.c.0.s8 %v1420
      %v1422 = vperm.slane %v1418, %v1421
      %v1423 = vrot.slane %v1359, 4
      %v1424 = vsel %vm748, %v1423, %v1357
      %v1426 = vunpack.c.l.s4 1983009808
      %v1427 = vunpack.c.0.s8 %v1426
      %v1428 = vperm.slane %v1424, %v1427
      %v1429 = vsel %vm748, %v1362, %v1351
      %v1431 = vunpack.c.l.s4 1983009808
      %v1432 = vunpack.c.0.s8 %v1431
      %v1433 = vperm.slane %v1429, %v1432
      %v1434 = vrot.slane %v1363, 4
      %v1435 = vsel %vm748, %v1434, %v1361
      %v1437 = vunpack.c.l.s4 1983009808
      %v1438 = vunpack.c.0.s8 %v1437
      %v1439 = vperm.slane %v1435, %v1438
      %v1440 = vrot.slane %v1428, 4
      %v1441 = vsel %vm748, %v1440, %v1422
      %v1442 = vrot.slane %v1422, 4
      %v1443 = vsel %vm748, %v1428, %v1442
      %v1445 = vunpack.c.l.s4 1934713408
      %v1446 = vunpack.c.0.s8 %v1445
      %v1447 = vperm.slane %v1441, %v1446
      %v1449 = vunpack.c.l.s4 1934713408
      %v1450 = vunpack.c.0.s8 %v1449
      %v1451 = vperm.slane %v1443, %v1450
      %v1452 = vrot.slane %v1439, 4
      %v1453 = vsel %vm748, %v1452, %v1433
      %v1454 = vrot.slane %v1433, 4
      %v1455 = vsel %vm748, %v1439, %v1454
      %v1457 = vunpack.c.l.s4 1934713408
      %v1458 = vunpack.c.0.s8 %v1457
      %v1459 = vperm.slane %v1453, %v1458
      %v1461 = vunpack.c.l.s4 1934713408
      %v1462 = vunpack.c.0.s8 %v1461
      %v1463 = vperm.slane %v1455, %v1462
      %v1464 = vrot.slane %v1459, 4
      %v1465 = vsel %vm748, %v1464, %v1447
      %v1466 = vrot.slane %v1447, 4
      %v1467 = vsel %vm748, %v1459, %v1466
      %v1468 = vrot.slane %v1463, 4
      %v1469 = vsel %vm748, %v1468, %v1451
      %v1470 = vrot.slane %v1451, 4
      %v1471 = vsel %vm748, %v1463, %v1470
      %v1472 = vpack.c.bf16 %v1411, %v1411
      %v1473 = vpack.c.bf16 %v1465, %v1465
      %v1474 = vpack.c.bf16 %v1413, %v1413
      %v1475 = vpack.c.bf16 %v1467, %v1467
      %v1476 = vpack.c.bf16 %v1415, %v1415
      %v1477 = vpack.c.bf16 %v1469, %v1469
      %v1478 = vpack.c.bf16 %v1417, %v1417
      %v1479 = vpack.c.bf16 %v1471, %v1471
      %vm1480 = vcmask 64512
      %v1482 = vsel %vm1480, %v968, 0
      %v1485 = vsel %vm1480, %v1220, 0
      %1487 = vmatpush.bf16.xpose.msra.mxu0 0
      %1488 = vmatpush.bf16.xpose.msra.mxu0 0
      %1489 = vmatpush.bf16.xpose.msra.mxu0 0
      %1490 = vmatpush.bf16.xpose.msra.mxu0 0
      %1491 = vmatpush.bf16.xpose.msra.mxu0 0
      %1492 = vmatpush.bf16.xpose.msra.mxu0 0
      %1493 = vmatpush.bf16.xpose.msra.mxu0 0
      %1494 = vmatpush.bf16.xpose.msra.mxu0 %v1485
      %1495 = vmatmul.bf16.gmra.mxu0 %v1482
      %v1496 = vpop.f32.mrf.mxu0
      %v1497 = vadd.f32 %v628, %v1496
      %v1498 = vpop.f32.mrf.mxu0
      %1499 = vdwg.mxu0
      %v1501 = vsel %vm1480, %v969, 0
      %v1504 = vsel %vm1480, %v1221, 0
      %1506 = vmatpush.bf16.xpose.msra.mxu0 0
      %1507 = vmatpush.bf16.xpose.msra.mxu0 0
      %1508 = vmatpush.bf16.xpose.msra.mxu0 0
      %1509 = vmatpush.bf16.xpose.msra.mxu0 0
      %1510 = vmatpush.bf16.xpose.msra.mxu0 0
      %1511 = vmatpush.bf16.xpose.msra.mxu0 0
      %1512 = vmatpush.bf16.xpose.msra.mxu0 0
      %1513 = vmatpush.bf16.xpose.msra.mxu0 %v1504
      %1514 = vmatmul.bf16.gmra.mxu0 %v1501
      %v1515 = vpop.f32.mrf.mxu0
      %v1516 = vadd.f32 %v628, %v1515
      %v1517 = vpop.f32.mrf.mxu0
      %1518 = vdwg.mxu0
      %v1520 = vsel %vm1480, %v970, 0
      %v1523 = vsel %vm1480, %v1222, 0
      %1525 = vmatpush.bf16.xpose.msra.mxu0 0
      %1526 = vmatpush.bf16.xpose.msra.mxu0 0
      %1527 = vmatpush.bf16.xpose.msra.mxu0 0
      %1528 = vmatpush.bf16.xpose.msra.mxu0 0
      %1529 = vmatpush.bf16.xpose.msra.mxu0 0
      %1530 = vmatpush.bf16.xpose.msra.mxu0 0
      %1531 = vmatpush.bf16.xpose.msra.mxu0 0
      %1532 = vmatpush.bf16.xpose.msra.mxu0 %v1523
      %1533 = vmatmul.bf16.gmra.mxu0 %v1520
      %v1534 = vpop.f32.mrf.mxu0
      %v1535 = vadd.f32 %v628, %v1534
      %v1536 = vpop.f32.mrf.mxu0
      %1537 = vdwg.mxu0
      %v1539 = vsel %vm1480, %v971, 0
      %v1542 = vsel %vm1480, %v1223, 0
      %1544 = vmatpush.bf16.xpose.msra.mxu0 0
      %1545 = vmatpush.bf16.xpose.msra.mxu0 0
      %1546 = vmatpush.bf16.xpose.msra.mxu0 0
      %1547 = vmatpush.bf16.xpose.msra.mxu0 0
      %1548 = vmatpush.bf16.xpose.msra.mxu0 0
      %1549 = vmatpush.bf16.xpose.msra.mxu0 0
      %1550 = vmatpush.bf16.xpose.msra.mxu0 0
      %1551 = vmatpush.bf16.xpose.msra.mxu0 %v1542
      %1552 = vmatmul.bf16.gmra.mxu0 %v1539
      %v1553 = vpop.f32.mrf.mxu0
      %v1554 = vadd.f32 %v628, %v1553
      %v1555 = vpop.f32.mrf.mxu0
      %1556 = vdwg.mxu0
      %v1558 = vsel %vm1480, %v972, 0
      %v1561 = vsel %vm1480, %v1224, 0
      %1563 = vmatpush.bf16.xpose.msra.mxu0 0
      %1564 = vmatpush.bf16.xpose.msra.mxu0 0
      %1565 = vmatpush.bf16.xpose.msra.mxu0 0
      %1566 = vmatpush.bf16.xpose.msra.mxu0 0
      %1567 = vmatpush.bf16.xpose.msra.mxu0 0
      %1568 = vmatpush.bf16.xpose.msra.mxu0 0
      %1569 = vmatpush.bf16.xpose.msra.mxu0 0
      %1570 = vmatpush.bf16.xpose.msra.mxu0 %v1561
      %1571 = vmatmul.bf16.gmra.mxu0 %v1558
      %v1572 = vpop.f32.mrf.mxu0
      %v1573 = vadd.f32 %v628, %v1572
      %v1574 = vpop.f32.mrf.mxu0
      %1575 = vdwg.mxu0
      %v1577 = vsel %vm1480, %v973, 0
      %v1580 = vsel %vm1480, %v1225, 0
      %1582 = vmatpush.bf16.xpose.msra.mxu0 0
      %1583 = vmatpush.bf16.xpose.msra.mxu0 0
      %1584 = vmatpush.bf16.xpose.msra.mxu0 0
      %1585 = vmatpush.bf16.xpose.msra.mxu0 0
      %1586 = vmatpush.bf16.xpose.msra.mxu0 0
      %1587 = vmatpush.bf16.xpose.msra.mxu0 0
      %1588 = vmatpush.bf16.xpose.msra.mxu0 0
      %1589 = vmatpush.bf16.xpose.msra.mxu0 %v1580
      %1590 = vmatmul.bf16.gmra.mxu0 %v1577
      %v1591 = vpop.f32.mrf.mxu0
      %v1592 = vadd.f32 %v628, %v1591
      %v1593 = vpop.f32.mrf.mxu0
      %1594 = vdwg.mxu0
      %v1596 = vsel %vm1480, %v974, 0
      %v1599 = vsel %vm1480, %v1226, 0
      %1601 = vmatpush.bf16.xpose.msra.mxu0 0
      %1602 = vmatpush.bf16.xpose.msra.mxu0 0
      %1603 = vmatpush.bf16.xpose.msra.mxu0 0
      %1604 = vmatpush.bf16.xpose.msra.mxu0 0
      %1605 = vmatpush.bf16.xpose.msra.mxu0 0
      %1606 = vmatpush.bf16.xpose.msra.mxu0 0
      %1607 = vmatpush.bf16.xpose.msra.mxu0 0
      %1608 = vmatpush.bf16.xpose.msra.mxu0 %v1599
      %1609 = vmatmul.bf16.gmra.mxu0 %v1596
      %v1610 = vpop.f32.mrf.mxu0
      %v1611 = vadd.f32 %v628, %v1610
      %v1612 = vpop.f32.mrf.mxu0
      %1613 = vdwg.mxu0
      %v1615 = vsel %vm1480, %v975, 0
      %v1618 = vsel %vm1480, %v1227, 0
      %1620 = vmatpush.bf16.xpose.msra.mxu0 0
      %1621 = vmatpush.bf16.xpose.msra.mxu0 0
      %1622 = vmatpush.bf16.xpose.msra.mxu0 0
      %1623 = vmatpush.bf16.xpose.msra.mxu0 0
      %1624 = vmatpush.bf16.xpose.msra.mxu0 0
      %1625 = vmatpush.bf16.xpose.msra.mxu0 0
      %1626 = vmatpush.bf16.xpose.msra.mxu0 0
      %1627 = vmatpush.bf16.xpose.msra.mxu0 %v1618
      %1628 = vmatmul.bf16.gmra.mxu0 %v1615
      %v1629 = vpop.f32.mrf.mxu0
      %v1630 = vadd.f32 %v628, %v1629
      %v1631 = vpop.f32.mrf.mxu0
      %1632 = vdwg.mxu0
      %v1633 = vsel %vm1480, %v1497, -inf
      %1634 = vmax.xlane.f32.xlu0 %v1633
      %v1635 = vpop.xlane.xlu0 %1634
      %v1636 = vsel %vm1480, %v1516, -inf
      %1637 = vmax.xlane.f32.xlu0 %v1636
      %v1638 = vpop.xlane.xlu0 %1637
      %v1639 = vsel %vm1480, %v1535, -inf
      %1640 = vmax.xlane.f32.xlu0 %v1639
      %v1641 = vpop.xlane.xlu0 %1640
      %v1642 = vsel %vm1480, %v1554, -inf
      %1643 = vmax.xlane.f32.xlu0 %v1642
      %v1644 = vpop.xlane.xlu0 %1643
      %v1645 = vsel %vm1480, %v1573, -inf
      %1646 = vmax.xlane.f32.xlu0 %v1645
      %v1647 = vpop.xlane.xlu0 %1646
      %v1648 = vsel %vm1480, %v1592, -inf
      %1649 = vmax.xlane.f32.xlu0 %v1648
      %v1650 = vpop.xlane.xlu0 %1649
      %v1651 = vsel %vm1480, %v1611, -inf
      %1652 = vmax.xlane.f32.xlu0 %v1651
      %v1653 = vpop.xlane.xlu0 %1652
      %v1654 = vsel %vm1480, %v1630, -inf
      %1655 = vmax.xlane.f32.xlu0 %v1654
      %v1656 = vpop.xlane.xlu0 %1655
      %v1657 = vsub.f32 %v1497, %v1635
      %v1658 = vsub.f32 %v1516, %v1638
      %v1659 = vsub.f32 %v1535, %v1641
      %v1660 = vsub.f32 %v1554, %v1644
      %v1661 = vsub.f32 %v1573, %v1647
      %v1662 = vsub.f32 %v1592, %v1650
      %v1663 = vsub.f32 %v1611, %v1653
      %v1664 = vsub.f32 %v1630, %v1656
      %v1665 = vmul.f32 %v1657, 1.442695
      %v1666 = vpow.pop %v1665
      %v1667 = vmul.f32 %v1658, 1.442695
      %v1668 = vpow.pop %v1667
      %v1669 = vmul.f32 %v1659, 1.442695
      %v1670 = vpow.pop %v1669
      %v1671 = vmul.f32 %v1660, 1.442695
      %v1672 = vpow.pop %v1671
      %v1673 = vmul.f32 %v1661, 1.442695
      %v1674 = vpow.pop %v1673
      %v1675 = vmul.f32 %v1662, 1.442695
      %v1676 = vpow.pop %v1675
      %v1677 = vmul.f32 %v1663, 1.442695
      %v1678 = vpow.pop %v1677
      %v1679 = vmul.f32 %v1664, 1.442695
      %v1680 = vpow.pop %v1679
      %v1681 = vsel %vm1480, %v1666, 0.0
      %1682 = vadd.xlane.f32.xlu0 %v1681
      %v1683 = vpop.xlane.xlu0 %1682
      %v1684 = vsel %vm1480, %v1668, 0.0
      %1685 = vadd.xlane.f32.xlu0 %v1684
      %v1686 = vpop.xlane.xlu0 %1685
      %v1687 = vsel %vm1480, %v1670, 0.0
      %1688 = vadd.xlane.f32.xlu0 %v1687
      %v1689 = vpop.xlane.xlu0 %1688
      %v1690 = vsel %vm1480, %v1672, 0.0
      %1691 = vadd.xlane.f32.xlu0 %v1690
      %v1692 = vpop.xlane.xlu0 %1691
      %v1693 = vsel %vm1480, %v1674, 0.0
      %1694 = vadd.xlane.f32.xlu0 %v1693
      %v1695 = vpop.xlane.xlu0 %1694
      %v1696 = vsel %vm1480, %v1676, 0.0
      %1697 = vadd.xlane.f32.xlu0 %v1696
      %v1698 = vpop.xlane.xlu0 %1697
      %v1699 = vsel %vm1480, %v1678, 0.0
      %1700 = vadd.xlane.f32.xlu0 %v1699
      %v1701 = vpop.xlane.xlu0 %1700
      %v1702 = vsel %vm1480, %v1680, 0.0
      %1703 = vadd.xlane.f32.xlu0 %v1702
      %v1704 = vpop.xlane.xlu0 %1703
      %v1705 = vrcp.pop %v1683
      %v1706 = vrcp.pop %v1686
      %v1707 = vrcp.pop %v1689
      %v1708 = vrcp.pop %v1692
      %v1709 = vrcp.pop %v1695
      %v1710 = vrcp.pop %v1698
      %v1711 = vrcp.pop %v1701
      %v1712 = vrcp.pop %v1704
      %v1713 = vmul.f32 %v1666, %v1705
      %v1714 = vmul.f32 %v1668, %v1706
      %v1715 = vmul.f32 %v1670, %v1707
      %v1716 = vmul.f32 %v1672, %v1708
      %v1717 = vmul.f32 %v1674, %v1709
      %v1718 = vmul.f32 %v1676, %v1710
      %v1719 = vmul.f32 %v1678, %v1711
      %v1720 = vmul.f32 %v1680, %v1712
      %v1721 = vpack.c.bf16 %v1713, %v1713
      %v1722 = vpack.c.bf16 %v1714, %v1714
      %v1723 = vpack.c.bf16 %v1715, %v1715
      %v1724 = vpack.c.bf16 %v1716, %v1716
      %v1725 = vpack.c.bf16 %v1717, %v1717
      %v1726 = vpack.c.bf16 %v1718, %v1718
      %v1727 = vpack.c.bf16 %v1719, %v1719
      %v1728 = vpack.c.bf16 %v1720, %v1720
      %v1730 = vsel %vm1480, %v1721, 0
      %vm1732 = vcmask 1043456
      %v1734 = vsel %vm1732, %v1472, 0
      %1736 = vmatpush.bf16.msra.mxu0 0
      %1737 = vmatpush.bf16.msra.mxu0 0
      %1738 = vmatpush.bf16.msra.mxu0 0
      %1739 = vmatpush.bf16.msra.mxu0 0
      %1740 = vmatpush.bf16.msra.mxu0 0
      %1741 = vmatpush.bf16.msra.mxu0 0
      %1742 = vmatpush.bf16.msra.mxu0 0
      %1743 = vmatpush.bf16.msra.mxu0 %v1734
      %1744 = vmatmul.bf16.gmra.mxu0 %v1730
      %v1745 = vpop.f32.mrf.mxu0
      %v1746 = vadd.f32 0.0, %v1745
      %v1747 = vpop.f32.mrf.mxu0
      %1748 = vdwg.mxu0
      %v1750 = vsel %vm1480, %v1722, 0
      %v1753 = vsel %vm1732, %v1473, 0
      %1755 = vmatpush.bf16.msra.mxu0 0
      %1756 = vmatpush.bf16.msra.mxu0 0
      %1757 = vmatpush.bf16.msra.mxu0 0
      %1758 = vmatpush.bf16.msra.mxu0 0
      %1759 = vmatpush.bf16.msra.mxu0 0
      %1760 = vmatpush.bf16.msra.mxu0 0
      %1761 = vmatpush.bf16.msra.mxu0 0
      %1762 = vmatpush.bf16.msra.mxu0 %v1753
      %1763 = vmatmul.bf16.gmra.mxu0 %v1750
      %v1764 = vpop.f32.mrf.mxu0
      %v1765 = vadd.f32 0.0, %v1764
      %v1766 = vpop.f32.mrf.mxu0
      %1767 = vdwg.mxu0
      %v1769 = vsel %vm1480, %v1723, 0
      %v1772 = vsel %vm1732, %v1474, 0
      %1774 = vmatpush.bf16.msra.mxu0 0
      %1775 = vmatpush.bf16.msra.mxu0 0
      %1776 = vmatpush.bf16.msra.mxu0 0
      %1777 = vmatpush.bf16.msra.mxu0 0
      %1778 = vmatpush.bf16.msra.mxu0 0
      %1779 = vmatpush.bf16.msra.mxu0 0
      %1780 = vmatpush.bf16.msra.mxu0 0
      %1781 = vmatpush.bf16.msra.mxu0 %v1772
      %1782 = vmatmul.bf16.gmra.mxu0 %v1769
      %v1783 = vpop.f32.mrf.mxu0
      %v1784 = vadd.f32 0.0, %v1783
      %v1785 = vpop.f32.mrf.mxu0
      %1786 = vdwg.mxu0
      %v1788 = vsel %vm1480, %v1724, 0
      %v1791 = vsel %vm1732, %v1475, 0
      %1793 = vmatpush.bf16.msra.mxu0 0
      %1794 = vmatpush.bf16.msra.mxu0 0
      %1795 = vmatpush.bf16.msra.mxu0 0
      %1796 = vmatpush.bf16.msra.mxu0 0
      %1797 = vmatpush.bf16.msra.mxu0 0
      %1798 = vmatpush.bf16.msra.mxu0 0
      %1799 = vmatpush.bf16.msra.mxu0 0
      %1800 = vmatpush.bf16.msra.mxu0 %v1791
      %1801 = vmatmul.bf16.gmra.mxu0 %v1788
      %v1802 = vpop.f32.mrf.mxu0
      %v1803 = vadd.f32 0.0, %v1802
      %v1804 = vpop.f32.mrf.mxu0
      %1805 = vdwg.mxu0
      %v1807 = vsel %vm1480, %v1725, 0
      %v1810 = vsel %vm1732, %v1476, 0
      %1812 = vmatpush.bf16.msra.mxu0 0
      %1813 = vmatpush.bf16.msra.mxu0 0
      %1814 = vmatpush.bf16.msra.mxu0 0
      %1815 = vmatpush.bf16.msra.mxu0 0
      %1816 = vmatpush.bf16.msra.mxu0 0
      %1817 = vmatpush.bf16.msra.mxu0 0
      %1818 = vmatpush.bf16.msra.mxu0 0
      %1819 = vmatpush.bf16.msra.mxu0 %v1810
      %1820 = vmatmul.bf16.gmra.mxu0 %v1807
      %v1821 = vpop.f32.mrf.mxu0
      %v1822 = vadd.f32 0.0, %v1821
      %v1823 = vpop.f32.mrf.mxu0
      %1824 = vdwg.mxu0
      %v1826 = vsel %vm1480, %v1726, 0
      %v1829 = vsel %vm1732, %v1477, 0
      %1831 = vmatpush.bf16.msra.mxu0 0
      %1832 = vmatpush.bf16.msra.mxu0 0
      %1833 = vmatpush.bf16.msra.mxu0 0
      %1834 = vmatpush.bf16.msra.mxu0 0
      %1835 = vmatpush.bf16.msra.mxu0 0
      %1836 = vmatpush.bf16.msra.mxu0 0
      %1837 = vmatpush.bf16.msra.mxu0 0
      %1838 = vmatpush.bf16.msra.mxu0 %v1829
      %1839 = vmatmul.bf16.gmra.mxu0 %v1826
      %v1840 = vpop.f32.mrf.mxu0
      %v1841 = vadd.f32 0.0, %v1840
      %v1842 = vpop.f32.mrf.mxu0
      %1843 = vdwg.mxu0
      %v1845 = vsel %vm1480, %v1727, 0
      %v1848 = vsel %vm1732, %v1478, 0
      %1850 = vmatpush.bf16.msra.mxu0 0
      %1851 = vmatpush.bf16.msra.mxu0 0
      %1852 = vmatpush.bf16.msra.mxu0 0
      %1853 = vmatpush.bf16.msra.mxu0 0
      %1854 = vmatpush.bf16.msra.mxu0 0
      %1855 = vmatpush.bf16.msra.mxu0 0
      %1856 = vmatpush.bf16.msra.mxu0 0
      %1857 = vmatpush.bf16.msra.mxu0 %v1848
      %1858 = vmatmul.bf16.gmra.mxu0 %v1845
      %v1859 = vpop.f32.mrf.mxu0
      %v1860 = vadd.f32 0.0, %v1859
      %v1861 = vpop.f32.mrf.mxu0
      %1862 = vdwg.mxu0
      %v1864 = vsel %vm1480, %v1728, 0
      %v1867 = vsel %vm1732, %v1479, 0
      %1869 = vmatpush.bf16.msra.mxu0 0
      %1870 = vmatpush.bf16.msra.mxu0 0
      %1871 = vmatpush.bf16.msra.mxu0 0
      %1872 = vmatpush.bf16.msra.mxu0 0
      %1873 = vmatpush.bf16.msra.mxu0 0
      %1874 = vmatpush.bf16.msra.mxu0 0
      %1875 = vmatpush.bf16.msra.mxu0 0
      %1876 = vmatpush.bf16.msra.mxu0 %v1867
      %1877 = vmatmul.bf16.gmra.mxu0 %v1864
      %v1878 = vpop.f32.mrf.mxu0
      %v1879 = vadd.f32 0.0, %v1878
      %v1880 = vpop.f32.mrf.mxu0
      %1881 = vdwg.mxu0
      %v1882 = vrot.slane %v1822, 4
      %v1883 = vsel %vm748, %v1882, %v1746
      %v1884 = vrot.slane %v1746, 4
      %v1885 = vsel %vm748, %v1822, %v1884
      %v1887 = vunpack.c.l.s4 1983009808
      %v1888 = vunpack.c.0.s8 %v1887
      %v1889 = vperm.slane %v1883, %v1888
      %v1891 = vunpack.c.l.s4 1983009808
      %v1892 = vunpack.c.0.s8 %v1891
      %v1893 = vperm.slane %v1885, %v1892
      %v1894 = vrot.slane %v1860, 4
      %v1895 = vsel %vm748, %v1894, %v1784
      %v1896 = vrot.slane %v1784, 4
      %v1897 = vsel %vm748, %v1860, %v1896
      %v1899 = vunpack.c.l.s4 1983009808
      %v1900 = vunpack.c.0.s8 %v1899
      %v1901 = vperm.slane %v1895, %v1900
      %v1903 = vunpack.c.l.s4 1983009808
      %v1904 = vunpack.c.0.s8 %v1903
      %v1905 = vperm.slane %v1897, %v1904
      %v1906 = vrot.slane %v1901, 4
      %v1907 = vsel %vm748, %v1906, %v1889
      %v1908 = vrot.slane %v1889, 4
      %v1909 = vsel %vm748, %v1901, %v1908
      %v1911 = vunpack.c.l.s4 1934713408
      %v1912 = vunpack.c.0.s8 %v1911
      %v1913 = vperm.slane %v1907, %v1912
      %v1915 = vunpack.c.l.s4 1934713408
      %v1916 = vunpack.c.0.s8 %v1915
      %v1917 = vperm.slane %v1909, %v1916
      %v1918 = vrot.slane %v1905, 4
      %v1919 = vsel %vm748, %v1918, %v1893
      %v1920 = vrot.slane %v1893, 4
      %v1921 = vsel %vm748, %v1905, %v1920
      %v1923 = vunpack.c.l.s4 1934713408
      %v1924 = vunpack.c.0.s8 %v1923
      %v1925 = vperm.slane %v1919, %v1924
      %v1927 = vunpack.c.l.s4 1934713408
      %v1928 = vunpack.c.0.s8 %v1927
      %v1929 = vperm.slane %v1921, %v1928
      %v1930 = vrot.slane %v1913, 4
      %v1931 = vsel %vm748, 0.0, %v1930
      %v1932 = vrot.slane %v1917, 4
      %v1933 = vsel %vm748, 0.0, %v1932
      %v1934 = vrot.slane %v1925, 4
      %v1935 = vsel %vm748, 0.0, %v1934
      %v1936 = vrot.slane %v1929, 4
      %v1937 = vsel %vm748, 0.0, %v1936
      %v1938 = vrot.slane %v1841, 4
      %v1939 = vsel %vm748, %v1938, %v1765
      %v1940 = vrot.slane %v1765, 4
      %v1941 = vsel %vm748, %v1841, %v1940
      %v1943 = vunpack.c.l.s4 1983009808
      %v1944 = vunpack.c.0.s8 %v1943
      %v1945 = vperm.slane %v1939, %v1944
      %v1947 = vunpack.c.l.s4 1983009808
      %v1948 = vunpack.c.0.s8 %v1947
      %v1949 = vperm.slane %v1941, %v1948
      %v1950 = vrot.slane %v1879, 4
      %v1951 = vsel %vm748, %v1950, %v1803
      %v1952 = vrot.slane %v1803, 4
      %v1953 = vsel %vm748, %v1879, %v1952
      %v1955 = vunpack.c.l.s4 1983009808
      %v1956 = vunpack.c.0.s8 %v1955
      %v1957 = vperm.slane %v1951, %v1956
      %v1959 = vunpack.c.l.s4 1983009808
      %v1960 = vunpack.c.0.s8 %v1959
      %v1961 = vperm.slane %v1953, %v1960
      %v1962 = vrot.slane %v1957, 4
      %v1963 = vsel %vm748, %v1962, %v1945
      %v1964 = vrot.slane %v1945, 4
      %v1965 = vsel %vm748, %v1957, %v1964
      %v1967 = vunpack.c.l.s4 1934713408
      %v1968 = vunpack.c.0.s8 %v1967
      %v1969 = vperm.slane %v1963, %v1968
      %v1971 = vunpack.c.l.s4 1934713408
      %v1972 = vunpack.c.0.s8 %v1971
      %v1973 = vperm.slane %v1965, %v1972
      %v1974 = vrot.slane %v1961, 4
      %v1975 = vsel %vm748, %v1974, %v1949
      %v1976 = vrot.slane %v1949, 4
      %v1977 = vsel %vm748, %v1961, %v1976
      %v1979 = vunpack.c.l.s4 1934713408
      %v1980 = vunpack.c.0.s8 %v1979
      %v1981 = vperm.slane %v1975, %v1980
      %v1983 = vunpack.c.l.s4 1934713408
      %v1984 = vunpack.c.0.s8 %v1983
      %v1985 = vperm.slane %v1977, %v1984
      %v1986 = vrot.slane %v1969, 4
      %v1987 = vsel %vm748, 0.0, %v1986
      %v1988 = vrot.slane %v1973, 4
      %v1989 = vsel %vm748, 0.0, %v1988
      %v1990 = vrot.slane %v1981, 4
      %v1991 = vsel %vm748, 0.0, %v1990
      %v1992 = vrot.slane %v1985, 4
      %v1993 = vsel %vm748, 0.0, %v1992
      %v1994 = vsel %vm748, %v1932, %v1913
      %v1996 = vunpack.c.l.s4 1983009808
      %v1997 = vunpack.c.0.s8 %v1996
      %v1998 = vperm.slane %v1994, %v1997
      %v1999 = vrot.slane %v1933, 4
      %v2000 = vsel %vm748, %v1999, %v1931
      %v2002 = vunpack.c.l.s4 1983009808
      %v2003 = vunpack.c.0.s8 %v2002
      %v2004 = vperm.slane %v2000, %v2003
      %v2005 = vsel %vm748, %v1936, %v1925
      %v2007 = vunpack.c.l.s4 1983009808
      %v2008 = vunpack.c.0.s8 %v2007
      %v2009 = vperm.slane %v2005, %v2008
      %v2010 = vrot.slane %v1937, 4
      %v2011 = vsel %vm748, %v2010, %v1935
      %v2013 = vunpack.c.l.s4 1983009808
      %v2014 = vunpack.c.0.s8 %v2013
      %v2015 = vperm.slane %v2011, %v2014
      %v2016 = vrot.slane %v2004, 4
      %v2017 = vsel %vm748, %v2016, %v1998
      %v2018 = vrot.slane %v1998, 4
      %v2019 = vsel %vm748, %v2004, %v2018
      %v2021 = vunpack.c.l.s4 1934713408
      %v2022 = vunpack.c.0.s8 %v2021
      %v2023 = vperm.slane %v2017, %v2022
      %v2025 = vunpack.c.l.s4 1934713408
      %v2026 = vunpack.c.0.s8 %v2025
      %v2027 = vperm.slane %v2019, %v2026
      %v2028 = vrot.slane %v2015, 4
      %v2029 = vsel %vm748, %v2028, %v2009
      %v2030 = vrot.slane %v2009, 4
      %v2031 = vsel %vm748, %v2015, %v2030
      %v2033 = vunpack.c.l.s4 1934713408
      %v2034 = vunpack.c.0.s8 %v2033
      %v2035 = vperm.slane %v2029, %v2034
      %v2037 = vunpack.c.l.s4 1934713408
      %v2038 = vunpack.c.0.s8 %v2037
      %v2039 = vperm.slane %v2031, %v2038
      %v2040 = vrot.slane %v2035, 4
      %v2041 = vsel %vm748, %v2040, %v2023
      %v2042 = vrot.slane %v2023, 4
      %v2043 = vsel %vm748, %v2035, %v2042
      %v2044 = vrot.slane %v2039, 4
      %v2045 = vsel %vm748, %v2044, %v2027
      %v2046 = vrot.slane %v2027, 4
      %v2047 = vsel %vm748, %v2039, %v2046
      %v2048 = vsel %vm748, %v1988, %v1969
      %v2050 = vunpack.c.l.s4 1983009808
      %v2051 = vunpack.c.0.s8 %v2050
      %v2052 = vperm.slane %v2048, %v2051
      %v2053 = vrot.slane %v1989, 4
      %v2054 = vsel %vm748, %v2053, %v1987
      %v2056 = vunpack.c.l.s4 1983009808
      %v2057 = vunpack.c.0.s8 %v2056
      %v2058 = vperm.slane %v2054, %v2057
      %v2059 = vsel %vm748, %v1992, %v1981
      %v2061 = vunpack.c.l.s4 1983009808
      %v2062 = vunpack.c.0.s8 %v2061
      %v2063 = vperm.slane %v2059, %v2062
      %v2064 = vrot.slane %v1993, 4
      %v2065 = vsel %vm748, %v2064, %v1991
      %v2067 = vunpack.c.l.s4 1983009808
      %v2068 = vunpack.c.0.s8 %v2067
      %v2069 = vperm.slane %v2065, %v2068
      %v2070 = vrot.slane %v2058, 4
      %v2071 = vsel %vm748, %v2070, %v2052
      %v2072 = vrot.slane %v2052, 4
      %v2073 = vsel %vm748, %v2058, %v2072
      %v2075 = vunpack.c.l.s4 1934713408
      %v2076 = vunpack.c.0.s8 %v2075
      %v2077 = vperm.slane %v2071, %v2076
      %v2079 = vunpack.c.l.s4 1934713408
      %v2080 = vunpack.c.0.s8 %v2079
      %v2081 = vperm.slane %v2073, %v2080
      %v2082 = vrot.slane %v2069, 4
      %v2083 = vsel %vm748, %v2082, %v2063
      %v2084 = vrot.slane %v2063, 4
      %v2085 = vsel %vm748, %v2069, %v2084
      %v2087 = vunpack.c.l.s4 1934713408
      %v2088 = vunpack.c.0.s8 %v2087
      %v2089 = vperm.slane %v2083, %v2088
      %v2091 = vunpack.c.l.s4 1934713408
      %v2092 = vunpack.c.0.s8 %v2091
      %v2093 = vperm.slane %v2085, %v2092
      %v2094 = vrot.slane %v2089, 4
      %v2095 = vsel %vm748, %v2094, %v2077
      %v2096 = vrot.slane %v2077, 4
      %v2097 = vsel %vm748, %v2089, %v2096
      %v2098 = vrot.slane %v2093, 4
      %v2099 = vsel %vm748, %v2098, %v2081
      %v2100 = vrot.slane %v2081, 4
      %v2101 = vsel %vm748, %v2093, %v2100
      %2104 = vrot.lane.b32.xlu0 %v2043, 8
      %v2105 = vpop.permute.xlu0 %2104
      %2106 = vrot.lane.b32.xlu0 %v2097, 8
      %v2107 = vpop.permute.xlu0 %2106
      %2112 = vrot.lane.b32.xlu0 %v2045, 16
      %v2113 = vpop.permute.xlu0 %2112
      %2114 = vrot.lane.b32.xlu0 %v2099, 16
      %v2115 = vpop.permute.xlu0 %2114
      %2120 = vrot.lane.b32.xlu0 %v2047, 24
      %v2121 = vpop.permute.xlu0 %2120
      %2122 = vrot.lane.b32.xlu0 %v2101, 24
      %v2123 = vpop.permute.xlu0 %2122
      %v2126 = vsel %vm1480, %v2041, %v2105
      %v2127 = vsel %vm1480, %v2095, %v2107
      %vm2128 = vcmask 130048
      %v2129 = vsel %vm2128, %v2126, %v2113
      %v2130 = vsel %vm2128, %v2127, %v2115
      %vm2131 = vcmask 195584
      %v2132 = vsel %vm2131, %v2129, %v2121
      %v2133 = vsel %vm2131, %v2130, %v2123
      %v2134 = vpack.c.bf16 %v2133, %v2132
      %v2135 = vld [vmem:[%s585] sm:$0xf]
      %v2136 = vld [vmem:[%s585 + $0x4] sm:$0xf]
      %v2137 = vld [vmem:[%s585 + $0x8] sm:$0xf]
      %v2138 = vld [vmem:[%s585 + $0xc] sm:$0xf]
      %v2139 = vld [vmem:[%s588] sm:$0x1]
      %v2141 = vperm.slane %v2139, 0
      %v2147 = vunpack.c.l.b16 %v2135
      %v2148 = vunpack.c.l.b16 %v2136
      %v2149 = vunpack.c.l.b16 %v2137
      %v2150 = vunpack.c.l.b16 %v2138
      %v2151 = vpack.c.b16 %v2148, %v2147
      %v2152 = vpack.c.b16 %v2150, %v2149
      %v2156 = vsel %vm631, %v2134, 0
      %2158 = vmatpush.bf16.msra.mxu0 0
      %2159 = vmatpush.bf16.msra.mxu0 0
      %2160 = vmatpush.bf16.msra.mxu0 0
      %2161 = vmatpush.bf16.msra.mxu0 0
      %2162 = vmatpush.bf16.msra.mxu0 0
      %2163 = vmatpush.bf16.msra.mxu0 0
      %2164 = vmatpush.bf16.msra.mxu0 %v2152
      %2165 = vmatpush.bf16.msra.mxu0 %v2151
      %2166 = vmatmul.bf16.gmra.mxu0 %v2156
      %v2167 = vpop.f32.mrf.mxu0
      %v2168 = vadd.f32 %v2141, %v2167
      %v2169 = vpop.f32.mrf.mxu0
      %v2170 = vadd.f32 %v2141, %v2169
      %2171 = vdwg.mxu0
      %v2172 = vadd.f32 %v621, %v2168
      %v2173 = vadd.f32 %v622, %v2170
      %v2174 = vld [vmem:[%s591] sm:$0x1]
      %v2175 = vld [vmem:[%s594] sm:$0x1]
      %v2176 = vsel %vm631, %v2172, 0.0
      %2177 = vadd.xlane.f32.xlu0 %v2176
      %v2178 = vpop.xlane.xlu0 %2177
      %v2179 = vsel %vm631, %v2173, 0.0
      %2180 = vadd.xlane.f32.xlu0 %v2179
      %v2181 = vpop.xlane.xlu0 %2180
      %v2182 = vmul.f32 %v2178, %v644
      %v2183 = vmul.f32 %v2181, %v644
      %v2184 = vsub.f32 %v2172, %v2182
      %v2185 = vsub.f32 %v2173, %v2183
      %v2186 = vmul.f32 %v2184, %v2184
      %v2187 = vmul.f32 %v2185, %v2185
      %v2188 = vsel %vm631, %v2186, 0.0
      %2189 = vadd.xlane.f32.xlu0 %v2188
      %v2190 = vpop.xlane.xlu0 %2189
      %v2191 = vsel %vm631, %v2187, 0.0
      %2192 = vadd.xlane.f32.xlu0 %v2191
      %v2193 = vpop.xlane.xlu0 %2192
      %v2194 = vmul.f32 %v2190, %v644
      %v2195 = vmul.f32 %v2193, %v644
      %v2196 = vadd.f32 %v2194, 1e-05
      %v2197 = vadd.f32 %v2195, 1e-05
      %v2198 = vrsqrt.pop %v2196
      %v2199 = vmul.f32 %v2198, %v2196
      %v2200 = vmul.f32 %v2199, %v2198
      %v2201 = vmul.f32 0.5, %v2200
      %v2202 = vsub.f32 1.5, %v2201
      %v2203 = vmul.f32 %v2198, %v2202
      %vm2204 = vweird.f32 %v2196
      %vm2205 = vweird.f32 %v2198
      %vm2206 = vmor %vm2204, %vm2205
      %v2207 = vsel %vm2206, %v2198, %v2203
      %v2208 = vrsqrt.pop %v2197
      %v2209 = vmul.f32 %v2208, %v2197
      %v2210 = vmul.f32 %v2209, %v2208
      %v2211 = vmul.f32 0.5, %v2210
      %v2212 = vsub.f32 1.5, %v2211
      %v2213 = vmul.f32 %v2208, %v2212
      %vm2214 = vweird.f32 %v2197
      %vm2215 = vweird.f32 %v2208
      %vm2216 = vmor %vm2214, %vm2215
      %v2217 = vsel %vm2216, %v2208, %v2213
      %v2218 = vmul.f32 %v2184, %v2207
      %v2219 = vmul.f32 %v2185, %v2217
      %v2221 = vperm.slane %v2174, 0
      %v2223 = vmul.f32 %v2221, %v2218
      %v2224 = vmul.f32 %v2221, %v2219
      %v2226 = vperm.slane %v2175, 0
      %v2228 = vadd.f32 %v2223, %v2226
      %v2229 = vadd.f32 %v2224, %v2226
      %v2230 = vpack.c.bf16 %v2229, %v2228
      %v2231 = vld [vmem:[%s599] sm:$0xf]
      %v2232 = vld [vmem:[%s599 + $0x4] sm:$0xf]
      %v2233 = vld [vmem:[%s599 + $0x8] sm:$0xf]
      %v2234 = vld [vmem:[%s599 + $0xc] sm:$0xf]
      %v2235 = vld [vmem:[%s602] sm:$0x1]
      %v2237 = vperm.slane %v2235, 0
      %v2243 = vunpack.c.l.b16 %v2231
      %v2244 = vunpack.c.l.b16 %v2232
      %v2245 = vunpack.c.l.b16 %v2233
      %v2246 = vunpack.c.l.b16 %v2234
      %v2247 = vpack.c.b16 %v2244, %v2243
      %v2248 = vpack.c.b16 %v2246, %v2245
      %v2252 = vsel %vm631, %v2230, 0
      %2254 = vmatpush.bf16.msra.mxu0 0
      %2255 = vmatpush.bf16.msra.mxu0 0
      %2256 = vmatpush.bf16.msra.mxu0 0
      %2257 = vmatpush.bf16.msra.mxu0 0
      %2258 = vmatpush.bf16.msra.mxu0 0
      %2259 = vmatpush.bf16.msra.mxu0 0
      %2260 = vmatpush.bf16.msra.mxu0 %v2248
      %2261 = vmatpush.bf16.msra.mxu0 %v2247
      %2262 = vmatmul.bf16.gmra.mxu0 %v2252
      %v2263 = vpop.f32.mrf.mxu0
      %v2264 = vadd.f32 %v2237, %v2263
      %v2265 = vpop.f32.mrf.mxu0
      %v2266 = vadd.f32 %v2237, %v2265
      %2267 = vdwg.mxu0
      %v2268 = vmul.f32 %v2264, 0.5
      %v2269 = vmul.f32 %v2266, 0.5
      %v2270 = vmul.f32 %v2264, %v2264
      %v2271 = vmul.f32 %v2266, %v2266
      %v2272 = vmul.f32 %v2270, %v2264
      %v2273 = vmul.f32 %v2271, %v2266
      %v2274 = vmul.f32 %v2272, 0.044715
      %v2275 = vmul.f32 %v2273, 0.044715
      %v2276 = vadd.f32 %v2264, %v2274
      %v2277 = vadd.f32 %v2266, %v2275
      %v2278 = vmul.f32 %v2276, 0.7978846
      %v2279 = vmul.f32 %v2277, 0.7978846
      %v2280 = vtanh.pop %v2278
      %v2281 = vtanh.pop %v2279
      %v2282 = vadd.f32 %v2280, 1.0
      %v2283 = vadd.f32 %v2281, 1.0
      %v2284 = vmul.f32 %v2268, %v2282
      %v2285 = vmul.f32 %v2269, %v2283
      %v2286 = vpack.c.bf16 %v2285, %v2284
      %v2287 = vld [vmem:[%s607] sm:$0xf]
      %v2288 = vld [vmem:[%s607 + $0x4] sm:$0xf]
      %v2289 = vld [vmem:[%s607 + $0x8] sm:$0xf]
      %v2290 = vld [vmem:[%s607 + $0xc] sm:$0xf]
      %v2291 = vld [vmem:[%s607 + $0x10] sm:$0xf]
      %v2292 = vld [vmem:[%s607 + $0x14] sm:$0xf]
      %v2293 = vld [vmem:[%s607 + $0x18] sm:$0xf]
      %v2294 = vld [vmem:[%s607 + $0x1c] sm:$0xf]
      %v2295 = vld [vmem:[%s607 + $0x20] sm:$0xf]
      %v2296 = vld [vmem:[%s607 + $0x24] sm:$0xf]
      %v2297 = vld [vmem:[%s607 + $0x28] sm:$0xf]
      %v2298 = vld [vmem:[%s607 + $0x2c] sm:$0xf]
      %v2299 = vld [vmem:[%s607 + $0x30] sm:$0xf]
      %v2300 = vld [vmem:[%s607 + $0x34] sm:$0xf]
      %v2301 = vld [vmem:[%s607 + $0x38] sm:$0xf]
      %v2302 = vld [vmem:[%s607 + $0x3c] sm:$0xf]
      %v2303 = vld [vmem:[%s610] sm:$0x1]
      %v2305 = vperm.slane %v2303, 0
      %v2323 = vunpack.c.l.b16 %v2287
      %v2324 = vunpack.c.l.b16 %v2288
      %v2325 = vunpack.c.l.b16 %v2289
      %v2326 = vunpack.c.l.b16 %v2290
      %v2327 = vunpack.c.l.b16 %v2291
      %v2328 = vunpack.c.l.b16 %v2292
      %v2329 = vunpack.c.l.b16 %v2293
      %v2330 = vunpack.c.l.b16 %v2294
      %v2331 = vunpack.c.l.b16 %v2295
      %v2332 = vunpack.c.l.b16 %v2296
      %v2333 = vunpack.c.l.b16 %v2297
      %v2334 = vunpack.c.l.b16 %v2298
      %v2335 = vunpack.c.l.b16 %v2299
      %v2336 = vunpack.c.l.b16 %v2300
      %v2337 = vunpack.c.l.b16 %v2301
      %v2338 = vunpack.c.l.b16 %v2302
      %v2339 = vpack.c.b16 %v2324, %v2323
      %v2340 = vpack.c.b16 %v2326, %v2325
      %v2341 = vpack.c.b16 %v2328, %v2327
      %v2342 = vpack.c.b16 %v2330, %v2329
      %v2343 = vpack.c.b16 %v2332, %v2331
      %v2344 = vpack.c.b16 %v2334, %v2333
      %v2345 = vpack.c.b16 %v2336, %v2335
      %v2346 = vpack.c.b16 %v2338, %v2337
      %2355 = vmatpush.bf16.msra.mxu0 %v2346
      %2356 = vmatpush.bf16.msra.mxu0 %v2345
      %2357 = vmatpush.bf16.msra.mxu0 %v2344
      %2358 = vmatpush.bf16.msra.mxu0 %v2343
      %2359 = vmatpush.bf16.msra.mxu0 %v2342
      %2360 = vmatpush.bf16.msra.mxu0 %v2341
      %2361 = vmatpush.bf16.msra.mxu0 %v2340
      %2362 = vmatpush.bf16.msra.mxu0 %v2339
      %2363 = vmatmul.bf16.gmra.mxu0 %v2286
      %v2364 = vpop.f32.mrf.mxu0
      %v2365 = vadd.f32 %v2305, %v2364
      %v2366 = vpop.f32.mrf.mxu0
      %v2367 = vadd.f32 %v2305, %v2366
      %2368 = vdwg.mxu0
      %v2369 = vadd.f32 %v2172, %v2365
      %v2370 = vadd.f32 %v2173, %v2367
      %2371 = vst.msk [vmem:[%s14] sm:$0xff] %vm631, %v2369
      %2372 = vst.msk [vmem:[%s14 + $0x8] sm:$0xff] %vm631, %v2370
      %p2373 = scmp.eq.s32.totalorder %s25, 1
      // Predicated region
      $region81: #{gpt_forward.2} parent=75 // pred_check
        %p2374 = pneg %p2373
      $region82: #{gpt_forward.2} parent=75 // pred_check_branch
        %2376 = sbr.rel (%p2374) target = $region84
      $region83: #{gpt_forward.2} parent=75 // pred_region
        %v2377 = vld [vmem:[%s12] sm:$0x1]
        %v2378 = vld [vmem:[%s13] sm:$0x1]
        %v2379 = vsel %vm631, %v2369, 0.0
        %2380 = vadd.xlane.f32.xlu0 %v2379
        %v2381 = vpop.xlane.xlu0 %2380
        %v2382 = vsel %vm631, %v2370, 0.0
        %2383 = vadd.xlane.f32.xlu0 %v2382
        %v2384 = vpop.xlane.xlu0 %2383
        %v2385 = vmul.f32 %v2381, %v644
        %v2386 = vmul.f32 %v2384, %v644
        %v2387 = vsub.f32 %v2369, %v2385
        %v2388 = vsub.f32 %v2370, %v2386
        %v2389 = vmul.f32 %v2387, %v2387
        %v2390 = vmul.f32 %v2388, %v2388
        %v2391 = vsel %vm631, %v2389, 0.0
        %2392 = vadd.xlane.f32.xlu0 %v2391
        %v2393 = vpop.xlane.xlu0 %2392
        %v2394 = vsel %vm631, %v2390, 0.0
        %2395 = vadd.xlane.f32.xlu0 %v2394
        %v2396 = vpop.xlane.xlu0 %2395
        %v2397 = vmul.f32 %v2393, %v644
        %v2398 = vmul.f32 %v2396, %v644
        %v2399 = vadd.f32 %v2397, 1e-05
        %v2400 = vadd.f32 %v2398, 1e-05
        %v2401 = vrsqrt.pop %v2399
        %v2402 = vmul.f32 %v2401, %v2399
        %v2403 = vmul.f32 %v2402, %v2401
        %v2404 = vmul.f32 0.5, %v2403
        %v2405 = vsub.f32 1.5, %v2404
        %v2406 = vmul.f32 %v2401, %v2405
        %vm2407 = vweird.f32 %v2399
        %vm2408 = vweird.f32 %v2401
        %vm2409 = vmor %vm2407, %vm2408
        %v2410 = vsel %vm2409, %v2401, %v2406
        %v2411 = vrsqrt.pop %v2400
        %v2412 = vmul.f32 %v2411, %v2400
        %v2413 = vmul.f32 %v2412, %v2411
        %v2414 = vmul.f32 0.5, %v2413
        %v2415 = vsub.f32 1.5, %v2414
        %v2416 = vmul.f32 %v2411, %v2415
        %vm2417 = vweird.f32 %v2400
        %vm2418 = vweird.f32 %v2411
        %vm2419 = vmor %vm2417, %vm2418
        %v2420 = vsel %vm2419, %v2411, %v2416
        %v2421 = vmul.f32 %v2387, %v2410
        %v2422 = vmul.f32 %v2388, %v2420
        %v2424 = vperm.slane %v2377, 0
        %v2426 = vmul.f32 %v2424, %v2421
        %v2427 = vmul.f32 %v2424, %v2422
        %v2429 = vperm.slane %v2378, 0
        %v2431 = vadd.f32 %v2426, %v2429
        %v2432 = vadd.f32 %v2427, %v2429
        %2433 = vst.msk [vmem:[%s14] sm:$0xff] %vm631, %v2431
        %2434 = vst.msk [vmem:[%s14 + $0x8] sm:$0xff] %vm631, %v2432
      $region84: #{gpt_forward.2} parent=75 // pred_fallthru
        _
      // Predicated region
      $region85: #{gpt_forward.2} parent=75 // pred_check
        %p2435 = pneg %p387
      $region86: #{gpt_forward.2} parent=75 // pred_check_branch
        %2437 = sbr.rel (%p2435) target = $region88
      $region87: #{gpt_forward.2} parent=75 // pred_region
        _
      $region88: #{gpt_forward.2} parent=75 // pred_fallthru
        _
      // Predicated region
      $region89: #{gpt_forward.2} parent=75 // pred_check
        %p2438 = pneg %p387
      $region90: #{gpt_forward.2} parent=75 // pred_check_branch
        %2440 = sbr.rel (%p2438) target = $region92
      $region91: #{gpt_forward.2} parent=75 // pred_region
        _
      $region92: #{gpt_forward.2} parent=75 // pred_fallthru
        _
    $region76: #{gpt_forward.2} parent=5 // pred_fallthru
      _
    %p2441 = scmp.le.s32.totalorder 2, %s20
    // Predicated region
    $region93: #{gpt_forward.2} parent=5 // pred_check
      %p2442 = pneg %p2441
    $region94: #{gpt_forward.2} parent=5 // pred_check_branch
      %2444 = sbr.rel (%p2442) target = $region96
    $region95: #{gpt_forward.2} parent=5 // pred_region
      %s2445 = ssub.s32 %s20, 2
    $region96: #{gpt_forward.2} parent=5 // pred_fallthru
      _
  $region6: #{gpt_forward.2} parent=0 // loop_footer
    %s24 = sadd.s32 1, %s20
  $region7: #{gpt_forward.2} parent=0 // loop_footer_branch
    %19 = sbr.rel target = $region3
  $region8: #{gpt_forward.2} parent=0 // loop_exit
    _

</llo_original>
